<compile_context>
chip_gen: v5e
topology: v5e:2x2
jax: 0.10.0
libtpu: 0.0.40
codegen_flags: <defaults>
</compile_context>

<pallas_src>
import jax
import jax.numpy as jnp
from jax.experimental import pallas as pl
from jax.experimental.pallas import tpu as pltpu

BN_EPS = 1e-5
LEAKY_SLOPE = 0.01  # nn.LeakyReLU default


def _round_up(x, m):
    return ((x + m - 1) // m) * m


def _vmem_budget_bytes():
    """Per-generation VMEM budget: 75% of physical, capped at 96 MiB (fallback 48 MiB)."""
    phys = 64 * 1024 * 1024
    try:
        info = pltpu.get_tpu_info()
        phys = int(getattr(info, "vmem_capacity_bytes", phys) or phys)
    except Exception:
        pass
    return min(int(phys * 3 // 4), 96 * 1024 * 1024)


def _derive_tile_rows(nrows, W, KW, Cin_p, Cp, vmem_budget):
    """Rows of (N*H) per grid step, sized from the VMEM budget (double-buffered streams)."""
    wtap = W + KW - 1
    per_row = (
        2 * 2 * wtap * Cin_p      # bf16 input tap block, double-buffered
        + 2 * 2 * wtap * Cin_p    # in-kernel value + kx-slice temporaries (bf16)
        + 2 * 2 * W * Cp          # bf16 conv-intermediate output block, double-buffered
        + 4 * W * Cp              # f32 accumulator scratch
    )
    fixed = 2 * 2 * KW * Cin_p * Cp + (2 << 20)   # weight taps (double-buffered) + slack
    tile_r = max(16, (vmem_budget - fixed) // per_row)
    tile_r = min(tile_r, max(16, 4096 // max(W, 1)))  # ~2-4k output rows saturates HBM roofline
    tile_r = min(tile_r, _round_up(nrows, 16))
    return max(16, (tile_r // 16) * 16)


# --------------------------------------------------------------------------
# Kernel A (grid = (n_tiles, KH)): tap-accumulated conv matmul.
#   For each ky grid step: 3 accumulating bf16 MXU dots (one per kx tap) into an f32
#   VMEM accumulator. At the last ky: write the bf16 conv intermediate and the per-tile
#   partial sum / sum-of-squares for BN statistics.
# --------------------------------------------------------------------------
def _make_conv_stats_kernel(W, KW):
    def kernel(x_ref, w_ref, conv_ref, psum_ref, psq_ref, acc_ref):
        ky = pl.program_id(1)

        @pl.when(ky == 0)
        def _init():
            acc_ref[...] = jnp.zeros_like(acc_ref)

        x = x_ref[...]                               # (W+KW-1, tile_r, Cin_p) bf16
        cin = x.shape[-1]
        acc = acc_ref[...]
        for kx in range(KW):
            xs = x[kx:kx + W].reshape(-1, cin)       # (W*tile_r, Cin_p): layout no-op slice+merge
            acc = acc + jnp.dot(xs, w_ref[kx], preferred_element_type=jnp.float32)
        acc_ref[...] = acc

        @pl.when(ky == pl.num_programs(1) - 1)
        def _finalize():
            conv_ref[...] = acc.astype(conv_ref.dtype).reshape(conv_ref.shape)
            psum_ref[...] = jnp.sum(acc, axis=0, keepdims=True)
            psq_ref[...] = jnp.sum(acc * acc, axis=0, keepdims=True)

    return kernel


# --------------------------------------------------------------------------
# Kernel B: fused BN affine (precomputed scale/shift) + LeakyReLU + residual add.
# --------------------------------------------------------------------------
def _bn_act_res_kernel(conv_ref, scale_ref, shift_ref, xres_ref, o_ref):
    y = conv_ref[...].astype(jnp.float32) * scale_ref[...] + shift_ref[...]
    y = jnp.where(y >= 0, y, LEAKY_SLOPE * y)
    o_ref[...] = y + xres_ref[...].astype(jnp.float32)


def res_conv_block_forward(x, weight, bias, gamma, beta):
    """x: (N, C, H, W) float32 (NCHW). Returns (N, C, H, W) = x + LeakyReLU(BN(conv(x)))."""
    N, Cin, H, W = x.shape
    Cout, Cin_w, KH, KW = weight.shape
    assert Cout == Cin == Cin_w, "ResConvBlock requires in_channels == out_channels"
    assert KH == 3 and KW == 3, "kernel specialized to 3x3 / stride 1 / padding 1"
    del bias  # exactly cancelled by training-mode BN mean subtraction

    nrows = N * H                       # image-row granularity for tiling
    M = N * H * W                       # total spatial positions (true BN count)
    Cin_p = _round_up(Cin, 128)
    Cp = _round_up(Cout, 128)

    vmem_limit = _vmem_budget_bytes()
    tile_r = _derive_tile_rows(nrows, W, KW, Cin_p, Cp, vmem_limit)
    Rp = _round_up(nrows, tile_r)
    n_tiles = Rp // tile_r

    # ---- glue (layout only, plain JAX): NCHW -> NHWC bf16, spatial pad, 3 ky-shifted views ----
    x_nhwc = jnp.transpose(x, (0, 2, 3, 1))                       # (N, H, W, Cin) f32
    x_bf = x_nhwc.astype(jnp.bfloat16)
    xpad = jnp.pad(x_bf, ((0, 0), (1, 1), (1, 1), (0, 0)))        # (N, H+2, W+2, Cin)

    taps = [xpad[:, ky:ky + H] for ky in range(KH)]               # each (N, H, W+2, Cin)
    x_shift = jnp.stack(taps, axis=0)                             # (KH, N, H, W+2, Cin)
    x_shift = jnp.transpose(x_shift, (0, 3, 1, 2, 4))             # (KH, W+2, N, H, Cin)
    x_shift = x_shift.reshape(KH, W + KW - 1, nrows, Cin)
    x_shift = jnp.pad(x_shift,
                      ((0, 0), (0, 0), (0, Rp - nrows), (0, Cin_p - Cin)))

    # weight (Cout, Cin, KH, KW) -> taps (KH, KW, Cin_p, Cp), bf16
    w_taps = jnp.transpose(weight, (2, 3, 1, 0)).astype(jnp.bfloat16)
    w_taps = jnp.pad(w_taps, ((0, 0), (0, 0), (0, Cin_p - Cin), (0, Cp - Cout)))

    # residual in the same (W, Rp, Cp) layout, bf16
    x_res = jnp.transpose(x_bf, (2, 0, 1, 3)).reshape(W, nrows, Cin)
    x_res = jnp.pad(x_res, ((0, 0), (0, Rp - nrows), (0, Cp - Cin)))

    gamma_p = jnp.pad(gamma.astype(jnp.float32).reshape(1, Cout), ((0, 0), (0, Cp - Cout)))
    beta_p = jnp.pad(beta.astype(jnp.float32).reshape(1, Cout), ((0, 0), (0, Cp - Cout)))

    # ---- phase 1: tap-accumulated conv matmul + per-tile BN partial statistics ----
    conv_p, psum, psq = pl.pallas_call(
        _make_conv_stats_kernel(W, KW),
        grid=(n_tiles, KH),
        in_specs=[
            pl.BlockSpec((None, W + KW - 1, tile_r, Cin_p), lambda i, ky: (ky, 0, i, 0)),
            pl.BlockSpec((None, KW, Cin_p, Cp), lambda i, ky: (ky, 0, 0, 0)),
        ],
        out_specs=[
            pl.BlockSpec((W, tile_r, Cp), lambda i, ky: (0, i, 0)),
            pl.BlockSpec((None, 1, Cp), lambda i, ky: (i, 0, 0)),
            pl.BlockSpec((None, 1, Cp), lambda i, ky: (i, 0, 0)),
        ],
        out_shape=(
            jax.ShapeDtypeStruct((W, Rp, Cp), jnp.bfloat16),      # conv intermediate (bf16)
            jax.ShapeDtypeStruct((n_tiles, 1, Cp), jnp.float32),  # per-tile sum
            jax.ShapeDtypeStruct((n_tiles, 1, Cp), jnp.float32),  # per-tile sum of squares
        ),
        scratch_shapes=[pltpu.VMEM((W * tile_r, Cp), jnp.float32)],
        compiler_params=pltpu.CompilerParams(
            dimension_semantics=("parallel", "arbitrary"),
            vmem_limit_bytes=vmem_limit),
    )(x_shift, w_taps)

    # ---- tiny stats fold: biased batch variance, fused BN scale/shift ----
    # Padded rows/channels contribute exact zeros to both partial sums (no bias in-kernel),
    # so dividing by the true M keeps the statistics exact.
    ssum = jnp.sum(psum, axis=0)                                  # (1, Cp)
    ssq = jnp.sum(psq, axis=0)                                    # (1, Cp)
    inv_m = jnp.float32(1.0 / M)
    mean = ssum * inv_m
    var = jnp.maximum(ssq * inv_m - mean * mean, 0.0)
    scale = gamma_p * jax.lax.rsqrt(var + BN_EPS)
    shift = beta_p - mean * scale

    # ---- phase 2: normalize + LeakyReLU + residual (fully parallel, lane-dense tiles) ----
    out_p = pl.pallas_call(
        _bn_act_res_kernel,
        grid=(n_tiles,),
        in_specs=[
            pl.BlockSpec((W, tile_r, Cp), lambda i: (0, i, 0)),
            pl.BlockSpec((1, Cp), lambda i: (0, 0)),
            pl.BlockSpec((1, Cp), lambda i: (0, 0)),
            pl.BlockSpec((W, tile_r, Cp), lambda i: (0, i, 0)),
        ],
        out_specs=pl.BlockSpec((W, tile_r, Cp), lambda i: (0, i, 0)),
        out_shape=jax.ShapeDtypeStruct((W, Rp, Cp), jnp.float32),
        compiler_params=pltpu.CompilerParams(
            dimension_semantics=("parallel",),
            vmem_limit_bytes=vmem_limit),
    )(conv_p, scale, shift, x_res)

    # slice off row / channel padding, back to NCHW for the PyTorch-facing interface
    out = out_p[:, :nrows, :Cout].reshape(W, N, H, Cout)
    return jnp.transpose(out, (1, 3, 2, 0))                        # (N, Cout, H, W)


def _reference(x, weight, bias, gamma, beta):
    """Pure-JAX f32 reference mirroring the PyTorch ResConvBlock forward (training-mode BN)."""
    y = jax.lax.conv_general_dilated(
        x, weight, window_strides=(1, 1), padding=((1, 1), (1, 1)),
        dimension_numbers=("NCHW", "OIHW", "NCHW"))
    y = y + bias.reshape(1, -1, 1, 1)
    mean = y.mean(axis=(0, 2, 3), keepdims=True)
    var = jnp.mean(jnp.square(y - mean), axis=(0, 2, 3), keepdims=True)
    yhat = (y - mean) * jax.lax.rsqrt(var + BN_EPS)
    out = yhat * gamma.reshape(1, -1, 1, 1) + beta.reshape(1, -1, 1, 1)
    out = jnp.where(out >= 0, out, LEAKY_SLOPE * out)
    return x + out


if __name__ == "__main__":
    # Small shapes consistent with the module: ResConvBlock(in_channels=4), N=2, H=W=16
    N, C, H, W, KH, KW = 2, 4, 16, 16, 3, 3

    key = jax.random.PRNGKey(0)
    k_x, k_w, k_b, k_g, k_be = jax.random.split(key, 5)

    x = jax.random.normal(k_x, (N, C, H, W), dtype=jnp.float32)

    fan_in = C * KH * KW
    bound = 1.0 / (fan_in ** 0.5)
    weight = jax.random.uniform(k_w, (C, C, KH, KW), jnp.float32, -bound, bound)
    bias = jax.random.uniform(k_b, (C,), jnp.float32, -bound, bound)
    # gamma/beta perturbed from the BatchNorm2d defaults so the affine path is exercised
    gamma = 1.0 + 0.1 * jax.random.normal(k_g, (C,), dtype=jnp.float32)
    beta = 0.1 * jax.random.normal(k_be, (C,), dtype=jnp.float32)

    out = res_conv_block_forward(x, weight, bias, gamma, beta)
    out = jax.block_until_ready(out)

    ref = _reference(x, weight, bias, gamma, beta)
    assert out.shape == (N, C, H, W)
    # bf16 MXU operands / bf16 conv intermediate with f32 accumulation -> loose tolerance
    assert jnp.allclose(out, ref, atol=5e-2, rtol=5e-2), "mismatch vs pure-JAX reference"

    print("KERNEL_OK")
</pallas_src>

<mosaic_0001>
module attributes {stable_mosaic.version = 11 : i64} {
  func.func @kernel(%arg0: i32, %arg1: i32, %arg2: memref<1x18x32x128xbf16, #tpu.memory_space<vmem>>, %arg3: memref<1x3x128x128xbf16, #tpu.memory_space<vmem>>, %arg4: memref<16x32x128xbf16, #tpu.memory_space<vmem>>, %arg5: memref<1x1x128xf32, #tpu.memory_space<vmem>>, %arg6: memref<1x1x128xf32, #tpu.memory_space<vmem>>, %arg7: memref<512x128xf32, #tpu.memory_space<vmem>>) attributes {dimension_semantics = [#tpu.dimension_semantics<parallel>, #tpu.dimension_semantics<arbitrary>], iteration_bounds = array<i64: 1, 3>, scalar_prefetch = 0 : i64, scratch_operands = 1 : i64, tpu.core_type = #tpu.core_type<tc>, window_params = [{transform_indices = @transform_0, window_bounds = array<i64: 1, 18, 32, 128>}, {transform_indices = @transform_1, window_bounds = array<i64: 1, 3, 128, 128>}, {transform_indices = @transform_2, window_bounds = array<i64: 16, 32, 128>}, {transform_indices = @transform_3, window_bounds = array<i64: 1, 1, 128>}, {transform_indices = @transform_4, window_bounds = array<i64: 1, 1, 128>}]} {
    %c0_i32 = arith.constant 0 : i32
    %0 = arith.cmpi eq, %arg1, %c0_i32 : i32
    %1 = arith.extui %0 : i1 to i32
    %c0_i32_0 = arith.constant 0 : i32
    %2 = arith.cmpi ne, %1, %c0_i32_0 : i32
    scf.if %2 {
      %cst_21 = arith.constant 0.000000e+00 : f32
      %28 = vector.broadcast %cst_21 : f32 to vector<512x128xf32>
      %c0_22 = arith.constant 0 : index
      %c0_23 = arith.constant 0 : index
      %29 = vector.load %arg7[%c0_22, %c0_23] : memref<512x128xf32, #tpu.memory_space<vmem>>, vector<512x128xf32>
      tpu.vector_store %arg7[%c0_22, %c0_23], %28 {strides = array<i32>} : memref<512x128xf32, #tpu.memory_space<vmem>>, vector<512x128xf32>,
    } else {
    }
    %c0 = arith.constant 0 : index
    %c0_1 = arith.constant 0 : index
    %c0_2 = arith.constant 0 : index
    %c0_3 = arith.constant 0 : index
    %3 = vector.load %arg2[%c0, %c0_1, %c0_2, %c0_3] : memref<1x18x32x128xbf16, #tpu.memory_space<vmem>>, vector<1x18x32x128xbf16>
    %4 = vector.shape_cast %3 : vector<1x18x32x128xbf16> to vector<18x32x128xbf16>
    %c0_4 = arith.constant 0 : index
    %c0_5 = arith.constant 0 : index
    %5 = vector.load %arg7[%c0_4, %c0_5] : memref<512x128xf32, #tpu.memory_space<vmem>>, vector<512x128xf32>
    %6 = vector.extract_strided_slice %4 {offsets = [0, 0, 0], sizes = [16, 32, 128], strides = [1, 1, 1]} : vector<18x32x128xbf16> to vector<16x32x128xbf16>
    %7 = vector.shape_cast %6 : vector<16x32x128xbf16> to vector<512x128xbf16>
    %c0_6 = arith.constant 0 : index
    %c0_7 = arith.constant 0 : index
    %c0_8 = arith.constant 0 : index
    %c0_9 = arith.constant 0 : index
    %8 = vector.load %arg3[%c0_6, %c0_7, %c0_8, %c0_9] : memref<1x3x128x128xbf16, #tpu.memory_space<vmem>>, vector<1x1x128x128xbf16>
    %9 = vector.shape_cast %8 : vector<1x1x128x128xbf16> to vector<128x128xbf16>
    %cst = arith.constant dense<0.000000e+00> : vector<512x128xf32>
    %10 = tpu.matmul %7, %9, %cst {dimension_numbers = #tpu.dot_dimension_numbers<[1], [0], [0], [1], [0, 0, 1, 1], [], []>} : vector<512x128xbf16>, vector<128x128xbf16>, vector<512x128xf32> -> vector<512x128xf32>
    %11 = arith.addf %5, %10 : vector<512x128xf32>
    %12 = vector.extract_strided_slice %4 {offsets = [1, 0, 0], sizes = [16, 32, 128], strides = [1, 1, 1]} : vector<18x32x128xbf16> to vector<16x32x128xbf16>
    %13 = vector.shape_cast %12 : vector<16x32x128xbf16> to vector<512x128xbf16>
    %c0_10 = arith.constant 0 : index
    %c1 = arith.constant 1 : index
    %c0_11 = arith.constant 0 : index
    %c0_12 = arith.constant 0 : index
    %14 = vector.load %arg3[%c0_10, %c1, %c0_11, %c0_12] : memref<1x3x128x128xbf16, #tpu.memory_space<vmem>>, vector<1x1x128x128xbf16>
    %15 = vector.shape_cast %14 : vector<1x1x128x128xbf16> to vector<128x128xbf16>
    %cst_13 = arith.constant dense<0.000000e+00> : vector<512x128xf32>
    %16 = tpu.matmul %13, %15, %cst_13 {dimension_numbers = #tpu.dot_dimension_numbers<[1], [0], [0], [1], [0, 0, 1, 1], [], []>} : vector<512x128xbf16>, vector<128x128xbf16>, vector<512x128xf32> -> vector<512x128xf32>
    %17 = arith.addf %11, %16 : vector<512x128xf32>
    %18 = vector.extract_strided_slice %4 {offsets = [2, 0, 0], sizes = [16, 32, 128], strides = [1, 1, 1]} : vector<18x32x128xbf16> to vector<16x32x128xbf16>
    %19 = vector.shape_cast %18 : vector<16x32x128xbf16> to vector<512x128xbf16>
    %c0_14 = arith.constant 0 : index
    %c2 = arith.constant 2 : index
    %c0_15 = arith.constant 0 : index
    %c0_16 = arith.constant 0 : index
    %20 = vector.load %arg3[%c0_14, %c2, %c0_15, %c0_16] : memref<1x3x128x128xbf16, #tpu.memory_space<vmem>>, vector<1x1x128x128xbf16>
    %21 = vector.shape_cast %20 : vector<1x1x128x128xbf16> to vector<128x128xbf16>
    %cst_17 = arith.constant dense<0.000000e+00> : vector<512x128xf32>
    %22 = tpu.matmul %19, %21, %cst_17 {dimension_numbers = #tpu.dot_dimension_numbers<[1], [0], [0], [1], [0, 0, 1, 1], [], []>} : vector<512x128xbf16>, vector<128x128xbf16>, vector<512x128xf32> -> vector<512x128xf32>
    %23 = arith.addf %17, %22 : vector<512x128xf32>
    %c0_18 = arith.constant 0 : index
    %c0_19 = arith.constant 0 : index
    %24 = vector.load %arg7[%c0_18, %c0_19] : memref<512x128xf32, #tpu.memory_space<vmem>>, vector<512x128xf32>
    tpu.vector_store %arg7[%c0_18, %c0_19], %23 {strides = array<i32>} : memref<512x128xf32, #tpu.memory_space<vmem>>, vector<512x128xf32>,
    %c2_i32 = arith.constant 2 : i32
    %25 = arith.cmpi eq, %arg1, %c2_i32 : i32
    %26 = arith.extui %25 : i1 to i32
    %c0_i32_20 = arith.constant 0 : i32
    %27 = arith.cmpi ne, %26, %c0_i32_20 : i32
    scf.if %27 {
      %28 = arith.truncf %23 : vector<512x128xf32> to vector<512x128xbf16>
      %29 = vector.shape_cast %28 : vector<512x128xbf16> to vector<16x32x128xbf16>
      %c0_21 = arith.constant 0 : index
      %c0_22 = arith.constant 0 : index
      %c0_23 = arith.constant 0 : index
      %30 = vector.load %arg4[%c0_21, %c0_22, %c0_23] : memref<16x32x128xbf16, #tpu.memory_space<vmem>>, vector<16x32x128xbf16>
      tpu.vector_store %arg4[%c0_21, %c0_22, %c0_23], %29 {strides = array<i32>} : memref<16x32x128xbf16, #tpu.memory_space<vmem>>, vector<16x32x128xbf16>,
      %cst_24 = arith.constant dense<0.000000e+00> : vector<128xf32>
      %31 = vector.multi_reduction <add>, %23, %cst_24 [0] : vector<512x128xf32> to vector<128xf32>
      %32 = vector.shape_cast %31 : vector<128xf32> to vector<1x128xf32>
      %c0_25 = arith.constant 0 : index
      %c0_26 = arith.constant 0 : index
      %c0_27 = arith.constant 0 : index
      %33 = vector.load %arg5[%c0_25, %c0_26, %c0_27] : memref<1x1x128xf32, #tpu.memory_space<vmem>>, vector<1x1x128xf32>
      %34 = vector.shape_cast %33 : vector<1x1x128xf32> to vector<1x128xf32>
      %35 = vector.shape_cast %32 : vector<1x128xf32> to vector<1x1x128xf32>
      tpu.vector_store %arg5[%c0_25, %c0_26, %c0_27], %35 {strides = array<i32>} : memref<1x1x128xf32, #tpu.memory_space<vmem>>, vector<1x1x128xf32>,
      %36 = arith.mulf %23, %23 : vector<512x128xf32>
      %cst_28 = arith.constant dense<0.000000e+00> : vector<128xf32>
      %37 = vector.multi_reduction <add>, %36, %cst_28 [0] : vector<512x128xf32> to vector<128xf32>
      %38 = vector.shape_cast %37 : vector<128xf32> to vector<1x128xf32>
      %c0_29 = arith.constant 0 : index
      %c0_30 = arith.constant 0 : index
      %c0_31 = arith.constant 0 : index
      %39 = vector.load %arg6[%c0_29, %c0_30, %c0_31] : memref<1x1x128xf32, #tpu.memory_space<vmem>>, vector<1x1x128xf32>
      %40 = vector.shape_cast %39 : vector<1x1x128xf32> to vector<1x128xf32>
      %41 = vector.shape_cast %38 : vector<1x128xf32> to vector<1x1x128xf32>
      tpu.vector_store %arg6[%c0_29, %c0_30, %c0_31], %41 {strides = array<i32>} : memref<1x1x128xf32, #tpu.memory_space<vmem>>, vector<1x1x128xf32>,
    } else {
    }
    return
  }
  func.func @transform_0(%arg0: i32, %arg1: i32) -> (i32, i32, i32, i32) {
    %c0_i32 = arith.constant 0 : i32
    %c0_i32_0 = arith.constant 0 : i32
    %c0_i32_1 = arith.constant 0 : i32
    return %arg1, %c0_i32, %arg0, %c0_i32_0 : i32, i32, i32, i32
  }
  func.func @transform_1(%arg0: i32, %arg1: i32) -> (i32, i32, i32, i32) {
    %c0_i32 = arith.constant 0 : i32
    %c0_i32_0 = arith.constant 0 : i32
    %c0_i32_1 = arith.constant 0 : i32
    %c0_i32_2 = arith.constant 0 : i32
    return %arg1, %c0_i32, %c0_i32_0, %c0_i32_1 : i32, i32, i32, i32
  }
  func.func @transform_2(%arg0: i32, %arg1: i32) -> (i32, i32, i32) {
    %c0_i32 = arith.constant 0 : i32
    %c0_i32_0 = arith.constant 0 : i32
    %c0_i32_1 = arith.constant 0 : i32
    return %c0_i32, %arg0, %c0_i32_0 : i32, i32, i32
  }
  func.func @transform_3(%arg0: i32, %arg1: i32) -> (i32, i32, i32) {
    %c0_i32 = arith.constant 0 : i32
    %c0_i32_0 = arith.constant 0 : i32
    %c0_i32_1 = arith.constant 0 : i32
    return %arg0, %c0_i32, %c0_i32_0 : i32, i32, i32
  }
  func.func @transform_4(%arg0: i32, %arg1: i32) -> (i32, i32, i32) {
    %c0_i32 = arith.constant 0 : i32
    %c0_i32_0 = arith.constant 0 : i32
    %c0_i32_1 = arith.constant 0 : i32
    return %arg0, %c0_i32, %c0_i32_0 : i32, i32, i32
  }
}

</mosaic_0001>

<llo_original>
// kernel: tpu_custom_call.1
$region0: #{tpu_custom_call.1}
  #allocation0 [shape = 'u32[]', space=smem, size = 0x4, offset = 0x4, fixed_abs, tag = 'smem constant byte address 0x4 - core index']
  #allocation1 [shape = 'u32[72,128]{1,0:T(1,128)}', space=vmem, size = 0x9000, scoped, tag = 'internal scratch']
  #allocation2 [shape = 'f32[512,128]{1,0:T(8,128)}', space=vmem, size = 0x40000, scoped, tag = 'scratch operand']
  %s0 = inlined_call_operand.hbm [shape: bf16[3,18,32,128], index: 0, kind: input, shape index: {}]
  %s1 = inlined_call_operand.hbm [shape: bf16[3,3,128,128], index: 1, kind: input, shape index: {}]
  %s2 = inlined_call_operand.hbm [shape: bf16[16,32,128], index: 2, kind: output, shape index: {0}]
  %s3 = inlined_call_operand.hbm [shape: f32[1,1,128], index: 3, kind: output, shape index: {1}]
  %s4 = inlined_call_operand.hbm [shape: f32[1,1,128], index: 4, kind: output, shape index: {2}]
  %5 = xla_tuple %s2, %s3, %s4
  %s6 = sld [smem:[#allocation0]]
  $region73: #{tpu_custom_call.1} parent=0
    _
  %s8 = ssub.s32 1, %s6
  %s9 = scalar_select 0, %s8, %s6
  $region1: #{tpu_custom_call.1} parent=0
    #allocation3 [shape = 'u8[294912]{0}', space=vmem, size = 0x48000, scoped, tag = 'input window, operand 0']
    #allocation4 [shape = 's32[2]{0}', space=sflag, size = 0x8, scoped, tag = 'scoped memory for tpu_custom_call.1']
    #allocation5 [shape = 's32[2]{0}', space=sflag, size = 0x8, scoped, tag = 'scoped memory for tpu_custom_call.1']
    #allocation6 [shape = 'u8[196608]{0}', space=vmem, size = 0x30000, scoped, tag = 'input window, operand 1']
    #allocation7 [shape = 's32[2]{0}', space=sflag, size = 0x8, scoped, tag = 'scoped memory for tpu_custom_call.1']
    #allocation8 [shape = 'u8[131072]{0}', space=vmem, size = 0x20000, scoped, tag = 'output window, operand 0, single buffered']
    #allocation9 [shape = 'u8[512]{0}', space=vmem, size = 0x400, scoped, tag = 'output window, operand 1, single buffered']
    #allocation10 [shape = 's32[1]{0}', space=sflag, size = 0x4, scoped, tag = 'scoped memory for tpu_custom_call.1']
    #allocation11 [shape = 'u8[512]{0}', space=vmem, size = 0x400, scoped, tag = 'output window, operand 2, single buffered']
    %10 = vsyncpa [#allocation4], 0
    %s11 = scalar_lea.sflag [#allocation4], 1
    %12 = vsyncpa %s11, 0
    %13 = vsyncpa [#allocation7], 0
    %s14 = scalar_lea.sflag [#allocation7], 1
    %15 = vsyncpa %s14, 0
    %16 = vsyncpa [#allocation5], 0
    %17 = vsyncpa [#allocation10], 0
    loop: start=0, step=1, limit=5
    $region2: #{tpu_custom_call.1} parent=1 // loop_pre_header
      _
    $region3: #{tpu_custom_call.1} parent=1 // loop_header
      %s19 = sphi 0, %s23
      %p20 = scmp.ge.s32.totalorder %s19, 5
      %s26 = sphi 0, %s38
      %s27 = sphi 0, %s34
      %s28 = sphi 0, %s26
      %s29 = sphi 0, %s27
      %s30 = sphi 0, %s28
      %s31 = sphi 0, %s29
      %s43 = sphi 0, %s45
      %s46 = sphi 0, %s43
      %s47 = sphi 0, %s46
      %s63 = sphi 0, %s47
      %s69 = sphi 0, %s71
      %s72 = sphi 0, %s69
      %s73 = sphi 0, %s72
      %s89 = sphi 0, %s73
      %s95 = sphi 0, %s97
      %s98 = sphi 0, %s95
      %s99 = sphi 0, %s98
      %s115 = sphi 0, %s99
      %s121 = sphi 0, %s123
      %s124 = sphi 0, %s121
      %s125 = sphi 0, %s124
      %s141 = sphi 0, %s125
      %s147 = sphi 0, %s149
      %s150 = sphi 0, %s147
      %s151 = sphi 0, %s150
      %s167 = sphi 0, %s151
    $region4: #{tpu_custom_call.1} parent=1 // loop_header_branch
      %22 = sbr.rel (%p20) target = $region8
    $region5: #{tpu_custom_call.1} parent=1 // loop_body
      %s24 = ssub.s32 %s19, 1
      %s25 = ssub.s32 %s19, 2
      %s32 = sadd.s32 1, %s27
      %p33 = scmp.ge.s32.totalorder %s32, 3
      %s34 = scalar_select %p33, 0, %s32
      %s35 = sadd.s32 1, %s26
      %s36 = scalar_select %p33, %s35, %s26
      %p37 = scmp.ge.s32.totalorder %s36, 1
      %s38 = scalar_select %p37, 0, %s36
      %s39 = ssub.s32 %s27, %s34
      %s40 = ssub.s32 %s26, %s38
      %s41 = sor.u32 %s39, %s40
      %p42 = scmp.eq.s32.totalorder %s41, 0
      %s44 = sadd.s32 %s43, 1
      %s45 = scalar_select %p42, %s43, %s44
      %p48 = pneg %p42
      %p49 = scmp.eq.s32.totalorder %s19, 2
      %p50 = por %p48, %p49
      %p51 = scmp.ne.s32.totalorder %s43, %s46
      %p52 = scmp.eq.s32.totalorder %s19, 0
      %p53 = por %p51, %p52
      %p54 = scmp.ne.s32.totalorder %s43, %s46
      %p55 = scmp.eq.s32.totalorder %s24, 2
      %p56 = por %p54, %p55
      %p57 = scmp.ne.s32.totalorder %s46, %s47
      %p58 = scmp.eq.s32.totalorder %s24, 0
      %p59 = por %p57, %p58
      %p60 = scmp.ne.s32.totalorder %s46, %s47
      %p61 = scmp.eq.s32.totalorder %s25, 2
      %p62 = por %p60, %p61
      %p64 = scmp.ne.s32.totalorder %s47, %s63
      %p65 = scmp.eq.s32.totalorder %s25, 0
      %p66 = por %p64, %p65
      %s67 = ssub.s32 %s27, %s34
      %p68 = scmp.eq.s32.totalorder %s67, 0
      %s70 = sadd.s32 %s69, 1
      %s71 = scalar_select %p68, %s69, %s70
      %p74 = pneg %p68
      %p75 = scmp.eq.s32.totalorder %s19, 2
      %p76 = por %p74, %p75
      %p77 = scmp.ne.s32.totalorder %s69, %s72
      %p78 = scmp.eq.s32.totalorder %s19, 0
      %p79 = por %p77, %p78
      %p80 = scmp.ne.s32.totalorder %s69, %s72
      %p81 = scmp.eq.s32.totalorder %s24, 2
      %p82 = por %p80, %p81
      %p83 = scmp.ne.s32.totalorder %s72, %s73
      %p84 = scmp.eq.s32.totalorder %s24, 0
      %p85 = por %p83, %p84
      %p86 = scmp.ne.s32.totalorder %s72, %s73
      %p87 = scmp.eq.s32.totalorder %s25, 2
      %p88 = por %p86, %p87
      %p90 = scmp.ne.s32.totalorder %s73, %s89
      %p91 = scmp.eq.s32.totalorder %s25, 0
      %p92 = por %p90, %p91
      %s93 = ssub.s32 %s26, %s38
      %p94 = scmp.eq.s32.totalorder %s93, 0
      %s96 = sadd.s32 %s95, 1
      %s97 = scalar_select %p94, %s95, %s96
      %p100 = pneg %p94
      %p101 = scmp.eq.s32.totalorder %s19, 2
      %p102 = por %p100, %p101
      %p103 = scmp.ne.s32.totalorder %s95, %s98
      %p104 = scmp.eq.s32.totalorder %s19, 0
      %p105 = por %p103, %p104
      %p106 = scmp.ne.s32.totalorder %s95, %s98
      %p107 = scmp.eq.s32.totalorder %s24, 2
      %p108 = por %p106, %p107
      %p109 = scmp.ne.s32.totalorder %s98, %s99
      %p110 = scmp.eq.s32.totalorder %s24, 0
      %p111 = por %p109, %p110
      %p112 = scmp.ne.s32.totalorder %s98, %s99
      %p113 = scmp.eq.s32.totalorder %s25, 2
      %p114 = por %p112, %p113
      %p116 = scmp.ne.s32.totalorder %s99, %s115
      %p117 = scmp.eq.s32.totalorder %s25, 0
      %p118 = por %p116, %p117
      %s119 = ssub.s32 %s26, %s38
      %p120 = scmp.eq.s32.totalorder %s119, 0
      %s122 = sadd.s32 %s121, 1
      %s123 = scalar_select %p120, %s121, %s122
      %p126 = pneg %p120
      %p127 = scmp.eq.s32.totalorder %s19, 2
      %p128 = por %p126, %p127
      %p129 = scmp.ne.s32.totalorder %s121, %s124
      %p130 = scmp.eq.s32.totalorder %s19, 0
      %p131 = por %p129, %p130
      %p132 = scmp.ne.s32.totalorder %s121, %s124
      %p133 = scmp.eq.s32.totalorder %s24, 2
      %p134 = por %p132, %p133
      %p135 = scmp.ne.s32.totalorder %s124, %s125
      %p136 = scmp.eq.s32.totalorder %s24, 0
      %p137 = por %p135, %p136
      %p138 = scmp.ne.s32.totalorder %s124, %s125
      %p139 = scmp.eq.s32.totalorder %s25, 2
      %p140 = por %p138, %p139
      %p142 = scmp.ne.s32.totalorder %s125, %s141
      %p143 = scmp.eq.s32.totalorder %s25, 0
      %p144 = por %p142, %p143
      %s145 = ssub.s32 %s26, %s38
      %p146 = scmp.eq.s32.totalorder %s145, 0
      %s148 = sadd.s32 %s147, 1
      %s149 = scalar_select %p146, %s147, %s148
      %p152 = pneg %p146
      %p153 = scmp.eq.s32.totalorder %s19, 2
      %p154 = por %p152, %p153
      %p155 = scmp.ne.s32.totalorder %s147, %s150
      %p156 = scmp.eq.s32.totalorder %s19, 0
      %p157 = por %p155, %p156
      %p158 = scmp.ne.s32.totalorder %s147, %s150
      %p159 = scmp.eq.s32.totalorder %s24, 2
      %p160 = por %p158, %p159
      %p161 = scmp.ne.s32.totalorder %s150, %s151
      %p162 = scmp.eq.s32.totalorder %s24, 0
      %p163 = por %p161, %p162
      %p164 = scmp.ne.s32.totalorder %s150, %s151
      %p165 = scmp.eq.s32.totalorder %s25, 2
      %p166 = por %p164, %p165
      %p168 = scmp.ne.s32.totalorder %s151, %s167
      %p169 = scmp.eq.s32.totalorder %s25, 0
      %p170 = por %p168, %p169
      %p171 = scmp.le.s32.totalorder 1, %s19
      %p172 = scmp.lt.s32.totalorder %s19, 4
      %p173 = pnand %p171, %p172
      %p174 = pneg %p173
      // Predicated region
      $region9: #{tpu_custom_call.1} parent=5 // pred_check
        _
      $region10: #{tpu_custom_call.1} parent=5 // pred_check_branch
        %176 = sbr.rel (%p173) target = $region12
      $region11: #{tpu_custom_call.1} parent=5 // pred_region
        %s177 = ssub.s32 %s19, 1
      $region12: #{tpu_custom_call.1} parent=5 // pred_fallthru
        _
      %p178 = scmp.lt.s32.totalorder %s19, 3
      // Predicated region
      $region13: #{tpu_custom_call.1} parent=5 // pred_check
        %p179 = pneg %p178
      $region14: #{tpu_custom_call.1} parent=5 // pred_check_branch
        %181 = sbr.rel (%p179) target = $region16
      $region15: #{tpu_custom_call.1} parent=5 // pred_region
        // Predicated region
        $region17: #{tpu_custom_call.1} parent=15 // pred_check
          %p182 = pneg %p53
        $region18: #{tpu_custom_call.1} parent=15 // pred_check_branch
          %184 = sbr.rel (%p182) target = $region20
        $region19: #{tpu_custom_call.1} parent=15 // pred_region
          %s185 = sand.u32 %s43, 1
          %s186 = scalar_lea.sflag [#allocation4], %s185
          %s187 = sand.u32 %s43, 1
          %s188 = smul.addr %s187, 288
          %s189 = scalar_lea.vmem [#allocation3], %s188
          %s190 = smul.u32 4, %s26
          %192 = vsyncadd %s186, 0
          %s193 = smul.addr %s27, 72
          %s194 = sadd.s32 %s190, %s193
          %s195 = smul.addr %s194, 4
          %s196 = scalar_lea.hbm %s0, %s195
          %s197 = sshll.u32 %s196, 4
          %s198 = int_to_ptr.hbm [resolvable:$true] %s197
          %s199 = sshll.u32 %s189, 4
          %s200 = int_to_ptr.vmem [resolvable:$true] %s199
          %205 = dma.hbm_to_vmem [thread:$0]  %s198, 4608, %s200, %s186, 64, 64, 4
        $region20: #{tpu_custom_call.1} parent=15 // pred_fallthru
          _
        // Predicated region
        $region21: #{tpu_custom_call.1} parent=15 // pred_check
          %p206 = pneg %p79
        $region22: #{tpu_custom_call.1} parent=15 // pred_check_branch
          %208 = sbr.rel (%p206) target = $region24
        $region23: #{tpu_custom_call.1} parent=15 // pred_region
          %s209 = sand.u32 %s69, 1
          %s210 = scalar_lea.sflag [#allocation7], %s209
          %s211 = sand.u32 %s69, 1
          %s212 = smul.addr %s211, 192
          %s213 = scalar_lea.vmem [#allocation6], %s212
          %215 = vsyncadd %s210, 0
          %s216 = smul.addr %s27, 48
          %s217 = smul.addr %s216, 4
          %s218 = scalar_lea.hbm %s1, %s217
          %s219 = sshll.u32 %s218, 4
          %s220 = int_to_ptr.hbm [resolvable:$true] %s219
          %s221 = sshll.u32 %s213, 4
          %s222 = int_to_ptr.vmem [resolvable:$true] %s221
          %227 = dma.hbm_to_vmem [thread:$0]  %s220, 3072, %s222, %s210, 64, 64, 4
        $region24: #{tpu_custom_call.1} parent=15 // pred_fallthru
          _
      $region16: #{tpu_custom_call.1} parent=5 // pred_fallthru
        _
      %p228 = scmp.le.s32.totalorder 1, %s19
      %p229 = scmp.lt.s32.totalorder %s19, 4
      %p230 = pnand %p228, %p229
      %p231 = pneg %p230
      // Predicated region
      $region25: #{tpu_custom_call.1} parent=5 // pred_check
        _
      $region26: #{tpu_custom_call.1} parent=5 // pred_check_branch
        %233 = sbr.rel (%p230) target = $region28
      $region27: #{tpu_custom_call.1} parent=5 // pred_region
        %s234 = ssub.s32 %s19, 1
        %s235 = sand.u32 %s46, 1
        %s236 = scalar_lea.sflag [#allocation4], %s235
        %s237 = sand.u32 %s46, 1
        %s238 = smul.addr %s237, 288
        %s239 = scalar_lea.vmem [#allocation3], %s238
        // Predicated region
        $region29: #{tpu_custom_call.1} parent=27 // pred_check
          %p240 = pneg %p59
        $region30: #{tpu_custom_call.1} parent=27 // pred_check_branch
          %242 = sbr.rel (%p240) target = $region32
        $region31: #{tpu_custom_call.1} parent=27 // pred_region
          %244 = dma.done %s236, 4608
        $region32: #{tpu_custom_call.1} parent=27 // pred_fallthru
          _
        %s245 = sand.u32 %s72, 1
        %s246 = scalar_lea.sflag [#allocation7], %s245
        %s247 = sand.u32 %s72, 1
        %s248 = smul.addr %s247, 192
        %s249 = scalar_lea.vmem [#allocation6], %s248
        // Predicated region
        $region33: #{tpu_custom_call.1} parent=27 // pred_check
          %p250 = pneg %p85
        $region34: #{tpu_custom_call.1} parent=27 // pred_check_branch
          %252 = sbr.rel (%p250) target = $region36
        $region35: #{tpu_custom_call.1} parent=27 // pred_region
          %254 = dma.done %s246, 3072
        $region36: #{tpu_custom_call.1} parent=27 // pred_fallthru
          _
        %s255 = sand.u32 %s46, 1
        %s256 = scalar_lea.sflag [#allocation4], %s255
        %s257 = sand.u32 %s46, 1
        %s258 = smul.addr %s257, 288
        %s259 = scalar_lea.vmem [#allocation3], %s258
        %p260 = pneg %p59
        %p261 = pneg %p56
        %s262 = sand.u32 %s72, 1
        %s263 = scalar_lea.sflag [#allocation7], %s262
        %s264 = sand.u32 %s72, 1
        %s265 = smul.addr %s264, 192
        %s266 = scalar_lea.vmem [#allocation6], %s265
        %p267 = pneg %p85
        %p268 = pneg %p82
        %p269 = pneg %p111
        %p270 = pneg %p108
        %p271 = pneg %p137
        %p272 = pneg %p134
        %p273 = pneg %p163
        %p274 = pneg %p160
        %s275 = smul.u32 4, %s28
        %s276 = smul.u32 4, %s28
        %p277 = scmp.eq.s32.totalorder %s29, 0
        // Predicated region
        $region37: #{tpu_custom_call.1} parent=27 // pred_check
          %p278 = pneg %p277
        $region38: #{tpu_custom_call.1} parent=27 // pred_check_branch
          %280 = sbr.rel (%p278) target = $region40
        $region39: #{tpu_custom_call.1} parent=27 // pred_region
          %281 = vst [vmem:[#allocation2] sm:$0xff] 0.0
          %282 = vst [vmem:[#allocation2 + $0x8] sm:$0xff] 0.0
          %283 = vst [vmem:[#allocation2 + $0x10] sm:$0xff] 0.0
          %284 = vst [vmem:[#allocation2 + $0x18] sm:$0xff] 0.0
          %285 = vst [vmem:[#allocation2 + $0x20] sm:$0xff] 0.0
          %286 = vst [vmem:[#allocation2 + $0x28] sm:$0xff] 0.0
          %287 = vst [vmem:[#allocation2 + $0x30] sm:$0xff] 0.0
          %288 = vst [vmem:[#allocation2 + $0x38] sm:$0xff] 0.0
          %289 = vst [vmem:[#allocation2 + $0x40] sm:$0xff] 0.0
          %290 = vst [vmem:[#allocation2 + $0x48] sm:$0xff] 0.0
          %291 = vst [vmem:[#allocation2 + $0x50] sm:$0xff] 0.0
          %292 = vst [vmem:[#allocation2 + $0x58] sm:$0xff] 0.0
          %293 = vst [vmem:[#allocation2 + $0x60] sm:$0xff] 0.0
          %294 = vst [vmem:[#allocation2 + $0x68] sm:$0xff] 0.0
          %295 = vst [vmem:[#allocation2 + $0x70] sm:$0xff] 0.0
          %296 = vst [vmem:[#allocation2 + $0x78] sm:$0xff] 0.0
          %297 = vst [vmem:[#allocation2 + $0x80] sm:$0xff] 0.0
          %298 = vst [vmem:[#allocation2 + $0x88] sm:$0xff] 0.0
          %299 = vst [vmem:[#allocation2 + $0x90] sm:$0xff] 0.0
          %300 = vst [vmem:[#allocation2 + $0x98] sm:$0xff] 0.0
          %301 = vst [vmem:[#allocation2 + $0xa0] sm:$0xff] 0.0
          %302 = vst [vmem:[#allocation2 + $0xa8] sm:$0xff] 0.0
          %303 = vst [vmem:[#allocation2 + $0xb0] sm:$0xff] 0.0
          %304 = vst [vmem:[#allocation2 + $0xb8] sm:$0xff] 0.0
          %305 = vst [vmem:[#allocation2 + $0xc0] sm:$0xff] 0.0
          %306 = vst [vmem:[#allocation2 + $0xc8] sm:$0xff] 0.0
          %307 = vst [vmem:[#allocation2 + $0xd0] sm:$0xff] 0.0
          %308 = vst [vmem:[#allocation2 + $0xd8] sm:$0xff] 0.0
          %309 = vst [vmem:[#allocation2 + $0xe0] sm:$0xff] 0.0
          %310 = vst [vmem:[#allocation2 + $0xe8] sm:$0xff] 0.0
          %311 = vst [vmem:[#allocation2 + $0xf0] sm:$0xff] 0.0
          %312 = vst [vmem:[#allocation2 + $0xf8] sm:$0xff] 0.0
          %313 = vst [vmem:[#allocation2 + $0x100] sm:$0xff] 0.0
          %314 = vst [vmem:[#allocation2 + $0x108] sm:$0xff] 0.0
          %315 = vst [vmem:[#allocation2 + $0x110] sm:$0xff] 0.0
          %316 = vst [vmem:[#allocation2 + $0x118] sm:$0xff] 0.0
          %317 = vst [vmem:[#allocation2 + $0x120] sm:$0xff] 0.0
          %318 = vst [vmem:[#allocation2 + $0x128] sm:$0xff] 0.0
          %319 = vst [vmem:[#allocation2 + $0x130] sm:$0xff] 0.0
          %320 = vst [vmem:[#allocation2 + $0x138] sm:$0xff] 0.0
          %321 = vst [vmem:[#allocation2 + $0x140] sm:$0xff] 0.0
          %322 = vst [vmem:[#allocation2 + $0x148] sm:$0xff] 0.0
          %323 = vst [vmem:[#allocation2 + $0x150] sm:$0xff] 0.0
          %324 = vst [vmem:[#allocation2 + $0x158] sm:$0xff] 0.0
          %325 = vst [vmem:[#allocation2 + $0x160] sm:$0xff] 0.0
          %326 = vst [vmem:[#allocation2 + $0x168] sm:$0xff] 0.0
          %327 = vst [vmem:[#allocation2 + $0x170] sm:$0xff] 0.0
          %328 = vst [vmem:[#allocation2 + $0x178] sm:$0xff] 0.0
          %329 = vst [vmem:[#allocation2 + $0x180] sm:$0xff] 0.0
          %330 = vst [vmem:[#allocation2 + $0x188] sm:$0xff] 0.0
          %331 = vst [vmem:[#allocation2 + $0x190] sm:$0xff] 0.0
          %332 = vst [vmem:[#allocation2 + $0x198] sm:$0xff] 0.0
          %333 = vst [vmem:[#allocation2 + $0x1a0] sm:$0xff] 0.0
          %334 = vst [vmem:[#allocation2 + $0x1a8] sm:$0xff] 0.0
          %335 = vst [vmem:[#allocation2 + $0x1b0] sm:$0xff] 0.0
          %336 = vst [vmem:[#allocation2 + $0x1b8] sm:$0xff] 0.0
          %337 = vst [vmem:[#allocation2 + $0x1c0] sm:$0xff] 0.0
          %338 = vst [vmem:[#allocation2 + $0x1c8] sm:$0xff] 0.0
          %339 = vst [vmem:[#allocation2 + $0x1d0] sm:$0xff] 0.0
          %340 = vst [vmem:[#allocation2 + $0x1d8] sm:$0xff] 0.0
          %341 = vst [vmem:[#allocation2 + $0x1e0] sm:$0xff] 0.0
          %342 = vst [vmem:[#allocation2 + $0x1e8] sm:$0xff] 0.0
          %343 = vst [vmem:[#allocation2 + $0x1f0] sm:$0xff] 0.0
          %344 = vst [vmem:[#allocation2 + $0x1f8] sm:$0xff] 0.0
        $region40: #{tpu_custom_call.1} parent=27 // pred_fallthru
          _
        %v345 = vld [vmem:[%s239] sm:$0xf]
        %v346 = vld [vmem:[%s239 + $0x4] sm:$0xf]
        %v347 = vld [vmem:[%s239 + $0x8] sm:$0xf]
        %v348 = vld [vmem:[%s239 + $0xc] sm:$0xf]
        %v349 = vld [vmem:[%s239 + $0x10] sm:$0xf]
        %v350 = vld [vmem:[%s239 + $0x14] sm:$0xf]
        %v351 = vld [vmem:[%s239 + $0x18] sm:$0xf]
        %v352 = vld [vmem:[%s239 + $0x1c] sm:$0xf]
        %v353 = vld [vmem:[%s239 + $0x20] sm:$0xf]
        %v354 = vld [vmem:[%s239 + $0x24] sm:$0xf]
        %v355 = vld [vmem:[%s239 + $0x28] sm:$0xf]
        %v356 = vld [vmem:[%s239 + $0x2c] sm:$0xf]
        %v357 = vld [vmem:[%s239 + $0x30] sm:$0xf]
        %v358 = vld [vmem:[%s239 + $0x34] sm:$0xf]
        %v359 = vld [vmem:[%s239 + $0x38] sm:$0xf]
        %v360 = vld [vmem:[%s239 + $0x3c] sm:$0xf]
        %v361 = vld [vmem:[%s239 + $0x40] sm:$0xf]
        %v362 = vld [vmem:[%s239 + $0x44] sm:$0xf]
        %v363 = vld [vmem:[%s239 + $0x48] sm:$0xf]
        %v364 = vld [vmem:[%s239 + $0x4c] sm:$0xf]
        %v365 = vld [vmem:[%s239 + $0x50] sm:$0xf]
        %v366 = vld [vmem:[%s239 + $0x54] sm:$0xf]
        %v367 = vld [vmem:[%s239 + $0x58] sm:$0xf]
        %v368 = vld [vmem:[%s239 + $0x5c] sm:$0xf]
        %v369 = vld [vmem:[%s239 + $0x60] sm:$0xf]
        %v370 = vld [vmem:[%s239 + $0x64] sm:$0xf]
        %v371 = vld [vmem:[%s239 + $0x68] sm:$0xf]
        %v372 = vld [vmem:[%s239 + $0x6c] sm:$0xf]
        %v373 = vld [vmem:[%s239 + $0x70] sm:$0xf]
        %v374 = vld [vmem:[%s239 + $0x74] sm:$0xf]
        %v375 = vld [vmem:[%s239 + $0x78] sm:$0xf]
        %v376 = vld [vmem:[%s239 + $0x7c] sm:$0xf]
        %v377 = vld [vmem:[%s239 + $0x80] sm:$0xf]
        %v378 = vld [vmem:[%s239 + $0x84] sm:$0xf]
        %v379 = vld [vmem:[%s239 + $0x88] sm:$0xf]
        %v380 = vld [vmem:[%s239 + $0x8c] sm:$0xf]
        %v381 = vld [vmem:[%s239 + $0x90] sm:$0xf]
        %v382 = vld [vmem:[%s239 + $0x94] sm:$0xf]
        %v383 = vld [vmem:[%s239 + $0x98] sm:$0xf]
        %v384 = vld [vmem:[%s239 + $0x9c] sm:$0xf]
        %v385 = vld [vmem:[%s239 + $0xa0] sm:$0xf]
        %v386 = vld [vmem:[%s239 + $0xa4] sm:$0xf]
        %v387 = vld [vmem:[%s239 + $0xa8] sm:$0xf]
        %v388 = vld [vmem:[%s239 + $0xac] sm:$0xf]
        %v389 = vld [vmem:[%s239 + $0xb0] sm:$0xf]
        %v390 = vld [vmem:[%s239 + $0xb4] sm:$0xf]
        %v391 = vld [vmem:[%s239 + $0xb8] sm:$0xf]
        %v392 = vld [vmem:[%s239 + $0xbc] sm:$0xf]
        %v393 = vld [vmem:[%s239 + $0xc0] sm:$0xf]
        %v394 = vld [vmem:[%s239 + $0xc4] sm:$0xf]
        %v395 = vld [vmem:[%s239 + $0xc8] sm:$0xf]
        %v396 = vld [vmem:[%s239 + $0xcc] sm:$0xf]
        %v397 = vld [vmem:[%s239 + $0xd0] sm:$0xf]
        %v398 = vld [vmem:[%s239 + $0xd4] sm:$0xf]
        %v399 = vld [vmem:[%s239 + $0xd8] sm:$0xf]
        %v400 = vld [vmem:[%s239 + $0xdc] sm:$0xf]
        %v401 = vld [vmem:[%s239 + $0xe0] sm:$0xf]
        %v402 = vld [vmem:[%s239 + $0xe4] sm:$0xf]
        %v403 = vld [vmem:[%s239 + $0xe8] sm:$0xf]
        %v404 = vld [vmem:[%s239 + $0xec] sm:$0xf]
        %v405 = vld [vmem:[%s239 + $0xf0] sm:$0xf]
        %v406 = vld [vmem:[%s239 + $0xf4] sm:$0xf]
        %v407 = vld [vmem:[%s239 + $0xf8] sm:$0xf]
        %v408 = vld [vmem:[%s239 + $0xfc] sm:$0xf]
        %v409 = vld [vmem:[%s239 + $0x100] sm:$0xf]
        %v410 = vld [vmem:[%s239 + $0x104] sm:$0xf]
        %v411 = vld [vmem:[%s239 + $0x108] sm:$0xf]
        %v412 = vld [vmem:[%s239 + $0x10c] sm:$0xf]
        %v413 = vld [vmem:[%s239 + $0x110] sm:$0xf]
        %v414 = vld [vmem:[%s239 + $0x114] sm:$0xf]
        %v415 = vld [vmem:[%s239 + $0x118] sm:$0xf]
        %v416 = vld [vmem:[%s239 + $0x11c] sm:$0xf]
        %v417 = vld [vmem:[#allocation2] sm:$0xff]
        %v418 = vld [vmem:[#allocation2 + $0x8] sm:$0xff]
        %v419 = vld [vmem:[#allocation2 + $0x10] sm:$0xff]
        %v420 = vld [vmem:[#allocation2 + $0x18] sm:$0xff]
        %v421 = vld [vmem:[#allocation2 + $0x20] sm:$0xff]
        %v422 = vld [vmem:[#allocation2 + $0x28] sm:$0xff]
        %v423 = vld [vmem:[#allocation2 + $0x30] sm:$0xff]
        %v424 = vld [vmem:[#allocation2 + $0x38] sm:$0xff]
        %v425 = vld [vmem:[#allocation2 + $0x40] sm:$0xff]
        %v426 = vld [vmem:[#allocation2 + $0x48] sm:$0xff]
        %v427 = vld [vmem:[#allocation2 + $0x50] sm:$0xff]
        %v428 = vld [vmem:[#allocation2 + $0x58] sm:$0xff]
        %v429 = vld [vmem:[#allocation2 + $0x60] sm:$0xff]
        %v430 = vld [vmem:[#allocation2 + $0x68] sm:$0xff]
        %v431 = vld [vmem:[#allocation2 + $0x70] sm:$0xff]
        %v432 = vld [vmem:[#allocation2 + $0x78] sm:$0xff]
        %v433 = vld [vmem:[#allocation2 + $0x80] sm:$0xff]
        %v434 = vld [vmem:[#allocation2 + $0x88] sm:$0xff]
        %v435 = vld [vmem:[#allocation2 + $0x90] sm:$0xff]
        %v436 = vld [vmem:[#allocation2 + $0x98] sm:$0xff]
        %v437 = vld [vmem:[#allocation2 + $0xa0] sm:$0xff]
        %v438 = vld [vmem:[#allocation2 + $0xa8] sm:$0xff]
        %v439 = vld [vmem:[#allocation2 + $0xb0] sm:$0xff]
        %v440 = vld [vmem:[#allocation2 + $0xb8] sm:$0xff]
        %v441 = vld [vmem:[#allocation2 + $0xc0] sm:$0xff]
        %v442 = vld [vmem:[#allocation2 + $0xc8] sm:$0xff]
        %v443 = vld [vmem:[#allocation2 + $0xd0] sm:$0xff]
        %v444 = vld [vmem:[#allocation2 + $0xd8] sm:$0xff]
        %v445 = vld [vmem:[#allocation2 + $0xe0] sm:$0xff]
        %v446 = vld [vmem:[#allocation2 + $0xe8] sm:$0xff]
        %v447 = vld [vmem:[#allocation2 + $0xf0] sm:$0xff]
        %v448 = vld [vmem:[#allocation2 + $0xf8] sm:$0xff]
        %v449 = vld [vmem:[#allocation2 + $0x100] sm:$0xff]
        %v450 = vld [vmem:[#allocation2 + $0x108] sm:$0xff]
        %v451 = vld [vmem:[#allocation2 + $0x110] sm:$0xff]
        %v452 = vld [vmem:[#allocation2 + $0x118] sm:$0xff]
        %v453 = vld [vmem:[#allocation2 + $0x120] sm:$0xff]
        %v454 = vld [vmem:[#allocation2 + $0x128] sm:$0xff]
        %v455 = vld [vmem:[#allocation2 + $0x130] sm:$0xff]
        %v456 = vld [vmem:[#allocation2 + $0x138] sm:$0xff]
        %v457 = vld [vmem:[#allocation2 + $0x140] sm:$0xff]
        %v458 = vld [vmem:[#allocation2 + $0x148] sm:$0xff]
        %v459 = vld [vmem:[#allocation2 + $0x150] sm:$0xff]
        %v460 = vld [vmem:[#allocation2 + $0x158] sm:$0xff]
        %v461 = vld [vmem:[#allocation2 + $0x160] sm:$0xff]
        %v462 = vld [vmem:[#allocation2 + $0x168] sm:$0xff]
        %v463 = vld [vmem:[#allocation2 + $0x170] sm:$0xff]
        %v464 = vld [vmem:[#allocation2 + $0x178] sm:$0xff]
        %v465 = vld [vmem:[#allocation2 + $0x180] sm:$0xff]
        %v466 = vld [vmem:[#allocation2 + $0x188] sm:$0xff]
        %v467 = vld [vmem:[#allocation2 + $0x190] sm:$0xff]
        %v468 = vld [vmem:[#allocation2 + $0x198] sm:$0xff]
        %v469 = vld [vmem:[#allocation2 + $0x1a0] sm:$0xff]
        %v470 = vld [vmem:[#allocation2 + $0x1a8] sm:$0xff]
        %v471 = vld [vmem:[#allocation2 + $0x1b0] sm:$0xff]
        %v472 = vld [vmem:[#allocation2 + $0x1b8] sm:$0xff]
        %v473 = vld [vmem:[#allocation2 + $0x1c0] sm:$0xff]
        %v474 = vld [vmem:[#allocation2 + $0x1c8] sm:$0xff]
        %v475 = vld [vmem:[#allocation2 + $0x1d0] sm:$0xff]
        %v476 = vld [vmem:[#allocation2 + $0x1d8] sm:$0xff]
        %v477 = vld [vmem:[#allocation2 + $0x1e0] sm:$0xff]
        %v478 = vld [vmem:[#allocation2 + $0x1e8] sm:$0xff]
        %v479 = vld [vmem:[#allocation2 + $0x1f0] sm:$0xff]
        %v480 = vld [vmem:[#allocation2 + $0x1f8] sm:$0xff]
        %v481 = vld [vmem:[%s249] sm:$0xf]
        %v482 = vld [vmem:[%s249 + $0x4] sm:$0xf]
        %v483 = vld [vmem:[%s249 + $0x8] sm:$0xf]
        %v484 = vld [vmem:[%s249 + $0xc] sm:$0xf]
        %v485 = vld [vmem:[%s249 + $0x10] sm:$0xf]
        %v486 = vld [vmem:[%s249 + $0x14] sm:$0xf]
        %v487 = vld [vmem:[%s249 + $0x18] sm:$0xf]
        %v488 = vld [vmem:[%s249 + $0x1c] sm:$0xf]
        %v489 = vld [vmem:[%s249 + $0x20] sm:$0xf]
        %v490 = vld [vmem:[%s249 + $0x24] sm:$0xf]
        %v491 = vld [vmem:[%s249 + $0x28] sm:$0xf]
        %v492 = vld [vmem:[%s249 + $0x2c] sm:$0xf]
        %v493 = vld [vmem:[%s249 + $0x30] sm:$0xf]
        %v494 = vld [vmem:[%s249 + $0x34] sm:$0xf]
        %v495 = vld [vmem:[%s249 + $0x38] sm:$0xf]
        %v496 = vld [vmem:[%s249 + $0x3c] sm:$0xf]
        %v561 = vunpack.c.l.b16 %v345
        %v562 = vunpack.c.l.b16 %v346
        %v563 = vunpack.c.l.b16 %v347
        %v564 = vunpack.c.l.b16 %v348
        %v565 = vunpack.c.l.b16 %v349
        %v566 = vunpack.c.l.b16 %v350
        %v567 = vunpack.c.l.b16 %v351
        %v568 = vunpack.c.l.b16 %v352
        %v569 = vunpack.c.l.b16 %v353
        %v570 = vunpack.c.l.b16 %v354
        %v571 = vunpack.c.l.b16 %v355
        %v572 = vunpack.c.l.b16 %v356
        %v573 = vunpack.c.l.b16 %v357
        %v574 = vunpack.c.l.b16 %v358
        %v575 = vunpack.c.l.b16 %v359
        %v576 = vunpack.c.l.b16 %v360
        %v577 = vunpack.c.l.b16 %v361
        %v578 = vunpack.c.l.b16 %v362
        %v579 = vunpack.c.l.b16 %v363
        %v580 = vunpack.c.l.b16 %v364
        %v581 = vunpack.c.l.b16 %v365
        %v582 = vunpack.c.l.b16 %v366
        %v583 = vunpack.c.l.b16 %v367
        %v584 = vunpack.c.l.b16 %v368
        %v585 = vunpack.c.l.b16 %v369
        %v586 = vunpack.c.l.b16 %v370
        %v587 = vunpack.c.l.b16 %v371
        %v588 = vunpack.c.l.b16 %v372
        %v589 = vunpack.c.l.b16 %v373
        %v590 = vunpack.c.l.b16 %v374
        %v591 = vunpack.c.l.b16 %v375
        %v592 = vunpack.c.l.b16 %v376
        %v593 = vunpack.c.l.b16 %v377
        %v594 = vunpack.c.l.b16 %v378
        %v595 = vunpack.c.l.b16 %v379
        %v596 = vunpack.c.l.b16 %v380
        %v597 = vunpack.c.l.b16 %v381
        %v598 = vunpack.c.l.b16 %v382
        %v599 = vunpack.c.l.b16 %v383
        %v600 = vunpack.c.l.b16 %v384
        %v601 = vunpack.c.l.b16 %v385
        %v602 = vunpack.c.l.b16 %v386
        %v603 = vunpack.c.l.b16 %v387
        %v604 = vunpack.c.l.b16 %v388
        %v605 = vunpack.c.l.b16 %v389
        %v606 = vunpack.c.l.b16 %v390
        %v607 = vunpack.c.l.b16 %v391
        %v608 = vunpack.c.l.b16 %v392
        %v609 = vunpack.c.l.b16 %v393
        %v610 = vunpack.c.l.b16 %v394
        %v611 = vunpack.c.l.b16 %v395
        %v612 = vunpack.c.l.b16 %v396
        %v613 = vunpack.c.l.b16 %v397
        %v614 = vunpack.c.l.b16 %v398
        %v615 = vunpack.c.l.b16 %v399
        %v616 = vunpack.c.l.b16 %v400
        %v617 = vunpack.c.l.b16 %v401
        %v618 = vunpack.c.l.b16 %v402
        %v619 = vunpack.c.l.b16 %v403
        %v620 = vunpack.c.l.b16 %v404
        %v621 = vunpack.c.l.b16 %v405
        %v622 = vunpack.c.l.b16 %v406
        %v623 = vunpack.c.l.b16 %v407
        %v624 = vunpack.c.l.b16 %v408
        %v625 = vpack.c.b16 %v562, %v561
        %v626 = vpack.c.b16 %v564, %v563
        %v627 = vpack.c.b16 %v566, %v565
        %v628 = vpack.c.b16 %v568, %v567
        %v629 = vpack.c.b16 %v570, %v569
        %v630 = vpack.c.b16 %v572, %v571
        %v631 = vpack.c.b16 %v574, %v573
        %v632 = vpack.c.b16 %v576, %v575
        %v633 = vpack.c.b16 %v578, %v577
        %v634 = vpack.c.b16 %v580, %v579
        %v635 = vpack.c.b16 %v582, %v581
        %v636 = vpack.c.b16 %v584, %v583
        %v637 = vpack.c.b16 %v586, %v585
        %v638 = vpack.c.b16 %v588, %v587
        %v639 = vpack.c.b16 %v590, %v589
        %v640 = vpack.c.b16 %v592, %v591
        %v641 = vpack.c.b16 %v594, %v593
        %v642 = vpack.c.b16 %v596, %v595
        %v643 = vpack.c.b16 %v598, %v597
        %v644 = vpack.c.b16 %v600, %v599
        %v645 = vpack.c.b16 %v602, %v601
        %v646 = vpack.c.b16 %v604, %v603
        %v647 = vpack.c.b16 %v606, %v605
        %v648 = vpack.c.b16 %v608, %v607
        %v649 = vpack.c.b16 %v610, %v609
        %v650 = vpack.c.b16 %v612, %v611
        %v651 = vpack.c.b16 %v614, %v613
        %v652 = vpack.c.b16 %v616, %v615
        %v653 = vpack.c.b16 %v618, %v617
        %v654 = vpack.c.b16 %v620, %v619
        %v655 = vpack.c.b16 %v622, %v621
        %v656 = vpack.c.b16 %v624, %v623
        %v705 = vunpack.c.l.b16 %v481
        %v706 = vunpack.c.l.b16 %v482
        %v707 = vunpack.c.l.b16 %v483
        %v708 = vunpack.c.l.b16 %v484
        %v709 = vunpack.c.l.b16 %v485
        %v710 = vunpack.c.l.b16 %v486
        %v711 = vunpack.c.l.b16 %v487
        %v712 = vunpack.c.l.b16 %v488
        %v713 = vunpack.c.l.b16 %v489
        %v714 = vunpack.c.l.b16 %v490
        %v715 = vunpack.c.l.b16 %v491
        %v716 = vunpack.c.l.b16 %v492
        %v717 = vunpack.c.l.b16 %v493
        %v718 = vunpack.c.l.b16 %v494
        %v719 = vunpack.c.l.b16 %v495
        %v720 = vunpack.c.l.b16 %v496
        %v721 = vpack.c.b16 %v706, %v705
        %v722 = vpack.c.b16 %v708, %v707
        %v723 = vpack.c.b16 %v710, %v709
        %v724 = vpack.c.b16 %v712, %v711
        %v725 = vpack.c.b16 %v714, %v713
        %v726 = vpack.c.b16 %v716, %v715
        %v727 = vpack.c.b16 %v718, %v717
        %v728 = vpack.c.b16 %v720, %v719
        %737 = vmatpush.bf16.msra.mxu0 %v728
        %738 = vmatpush.bf16.msra.mxu0 %v727
        %739 = vmatpush.bf16.msra.mxu0 %v726
        %740 = vmatpush.bf16.msra.mxu0 %v725
        %741 = vmatpush.bf16.msra.mxu0 %v724
        %742 = vmatpush.bf16.msra.mxu0 %v723
        %743 = vmatpush.bf16.msra.mxu0 %v722
        %744 = vmatpush.bf16.msra.mxu0 %v721
        %745 = vmatmul.bf16.gmra.mxu0 %v625
        %v746 = vpop.f32.mrf.mxu0
        %v747 = vadd.f32 0.0, %v746
        %v748 = vpop.f32.mrf.mxu0
        %v749 = vadd.f32 0.0, %v748
        %750 = vmatmul.bf16.gmra.mxu0 %v626
        %v751 = vpop.f32.mrf.mxu0
        %v752 = vadd.f32 0.0, %v751
        %v753 = vpop.f32.mrf.mxu0
        %v754 = vadd.f32 0.0, %v753
        %755 = vmatmul.bf16.gmra.mxu0 %v627
        %v756 = vpop.f32.mrf.mxu0
        %v757 = vadd.f32 0.0, %v756
        %v758 = vpop.f32.mrf.mxu0
        %v759 = vadd.f32 0.0, %v758
        %760 = vmatmul.bf16.gmra.mxu0 %v628
        %v761 = vpop.f32.mrf.mxu0
        %v762 = vadd.f32 0.0, %v761
        %v763 = vpop.f32.mrf.mxu0
        %v764 = vadd.f32 0.0, %v763
        %765 = vmatmul.bf16.gmra.mxu0 %v629
        %v766 = vpop.f32.mrf.mxu0
        %v767 = vadd.f32 0.0, %v766
        %v768 = vpop.f32.mrf.mxu0
        %v769 = vadd.f32 0.0, %v768
        %770 = vmatmul.bf16.gmra.mxu0 %v630
        %v771 = vpop.f32.mrf.mxu0
        %v772 = vadd.f32 0.0, %v771
        %v773 = vpop.f32.mrf.mxu0
        %v774 = vadd.f32 0.0, %v773
        %775 = vmatmul.bf16.gmra.mxu0 %v631
        %v776 = vpop.f32.mrf.mxu0
        %v777 = vadd.f32 0.0, %v776
        %v778 = vpop.f32.mrf.mxu0
        %v779 = vadd.f32 0.0, %v778
        %780 = vmatmul.bf16.gmra.mxu0 %v632
        %v781 = vpop.f32.mrf.mxu0
        %v782 = vadd.f32 0.0, %v781
        %v783 = vpop.f32.mrf.mxu0
        %v784 = vadd.f32 0.0, %v783
        %785 = vmatmul.bf16.gmra.mxu0 %v633
        %v786 = vpop.f32.mrf.mxu0
        %v787 = vadd.f32 0.0, %v786
        %v788 = vpop.f32.mrf.mxu0
        %v789 = vadd.f32 0.0, %v788
        %790 = vmatmul.bf16.gmra.mxu0 %v634
        %v791 = vpop.f32.mrf.mxu0
        %v792 = vadd.f32 0.0, %v791
        %v793 = vpop.f32.mrf.mxu0
        %v794 = vadd.f32 0.0, %v793
        %795 = vmatmul.bf16.gmra.mxu0 %v635
        %v796 = vpop.f32.mrf.mxu0
        %v797 = vadd.f32 0.0, %v796
        %v798 = vpop.f32.mrf.mxu0
        %v799 = vadd.f32 0.0, %v798
        %800 = vmatmul.bf16.gmra.mxu0 %v636
        %v801 = vpop.f32.mrf.mxu0
        %v802 = vadd.f32 0.0, %v801
        %v803 = vpop.f32.mrf.mxu0
        %v804 = vadd.f32 0.0, %v803
        %805 = vmatmul.bf16.gmra.mxu0 %v637
        %v806 = vpop.f32.mrf.mxu0
        %v807 = vadd.f32 0.0, %v806
        %v808 = vpop.f32.mrf.mxu0
        %v809 = vadd.f32 0.0, %v808
        %810 = vmatmul.bf16.gmra.mxu0 %v638
        %v811 = vpop.f32.mrf.mxu0
        %v812 = vadd.f32 0.0, %v811
        %v813 = vpop.f32.mrf.mxu0
        %v814 = vadd.f32 0.0, %v813
        %815 = vmatmul.bf16.gmra.mxu0 %v639
        %v816 = vpop.f32.mrf.mxu0
        %v817 = vadd.f32 0.0, %v816
        %v818 = vpop.f32.mrf.mxu0
        %v819 = vadd.f32 0.0, %v818
        %820 = vmatmul.bf16.gmra.mxu0 %v640
        %v821 = vpop.f32.mrf.mxu0
        %v822 = vadd.f32 0.0, %v821
        %v823 = vpop.f32.mrf.mxu0
        %v824 = vadd.f32 0.0, %v823
        %825 = vmatmul.bf16.gmra.mxu0 %v641
        %v826 = vpop.f32.mrf.mxu0
        %v827 = vadd.f32 0.0, %v826
        %v828 = vpop.f32.mrf.mxu0
        %v829 = vadd.f32 0.0, %v828
        %830 = vmatmul.bf16.gmra.mxu0 %v642
        %v831 = vpop.f32.mrf.mxu0
        %v832 = vadd.f32 0.0, %v831
        %v833 = vpop.f32.mrf.mxu0
        %v834 = vadd.f32 0.0, %v833
        %835 = vmatmul.bf16.gmra.mxu0 %v643
        %v836 = vpop.f32.mrf.mxu0
        %v837 = vadd.f32 0.0, %v836
        %v838 = vpop.f32.mrf.mxu0
        %v839 = vadd.f32 0.0, %v838
        %840 = vmatmul.bf16.gmra.mxu0 %v644
        %v841 = vpop.f32.mrf.mxu0
        %v842 = vadd.f32 0.0, %v841
        %v843 = vpop.f32.mrf.mxu0
        %v844 = vadd.f32 0.0, %v843
        %845 = vmatmul.bf16.gmra.mxu0 %v645
        %v846 = vpop.f32.mrf.mxu0
        %v847 = vadd.f32 0.0, %v846
        %v848 = vpop.f32.mrf.mxu0
        %v849 = vadd.f32 0.0, %v848
        %850 = vmatmul.bf16.gmra.mxu0 %v646
        %v851 = vpop.f32.mrf.mxu0
        %v852 = vadd.f32 0.0, %v851
        %v853 = vpop.f32.mrf.mxu0
        %v854 = vadd.f32 0.0, %v853
        %855 = vmatmul.bf16.gmra.mxu0 %v647
        %v856 = vpop.f32.mrf.mxu0
        %v857 = vadd.f32 0.0, %v856
        %v858 = vpop.f32.mrf.mxu0
        %v859 = vadd.f32 0.0, %v858
        %860 = vmatmul.bf16.gmra.mxu0 %v648
        %v861 = vpop.f32.mrf.mxu0
        %v862 = vadd.f32 0.0, %v861
        %v863 = vpop.f32.mrf.mxu0
        %v864 = vadd.f32 0.0, %v863
        %865 = vmatmul.bf16.gmra.mxu0 %v649
        %v866 = vpop.f32.mrf.mxu0
        %v867 = vadd.f32 0.0, %v866
        %v868 = vpop.f32.mrf.mxu0
        %v869 = vadd.f32 0.0, %v868
        %870 = vmatmul.bf16.gmra.mxu0 %v650
        %v871 = vpop.f32.mrf.mxu0
        %v872 = vadd.f32 0.0, %v871
        %v873 = vpop.f32.mrf.mxu0
        %v874 = vadd.f32 0.0, %v873
        %875 = vmatmul.bf16.gmra.mxu0 %v651
        %v876 = vpop.f32.mrf.mxu0
        %v877 = vadd.f32 0.0, %v876
        %v878 = vpop.f32.mrf.mxu0
        %v879 = vadd.f32 0.0, %v878
        %880 = vmatmul.bf16.gmra.mxu0 %v652
        %v881 = vpop.f32.mrf.mxu0
        %v882 = vadd.f32 0.0, %v881
        %v883 = vpop.f32.mrf.mxu0
        %v884 = vadd.f32 0.0, %v883
        %885 = vmatmul.bf16.gmra.mxu0 %v653
        %v886 = vpop.f32.mrf.mxu0
        %v887 = vadd.f32 0.0, %v886
        %v888 = vpop.f32.mrf.mxu0
        %v889 = vadd.f32 0.0, %v888
        %890 = vmatmul.bf16.gmra.mxu0 %v654
        %v891 = vpop.f32.mrf.mxu0
        %v892 = vadd.f32 0.0, %v891
        %v893 = vpop.f32.mrf.mxu0
        %v894 = vadd.f32 0.0, %v893
        %895 = vmatmul.bf16.gmra.mxu0 %v655
        %v896 = vpop.f32.mrf.mxu0
        %v897 = vadd.f32 0.0, %v896
        %v898 = vpop.f32.mrf.mxu0
        %v899 = vadd.f32 0.0, %v898
        %900 = vmatmul.bf16.gmra.mxu0 %v656
        %v901 = vpop.f32.mrf.mxu0
        %v902 = vadd.f32 0.0, %v901
        %v903 = vpop.f32.mrf.mxu0
        %v904 = vadd.f32 0.0, %v903
        %905 = vdwg.mxu0
        %v906 = vadd.f32 %v417, %v747
        %v907 = vadd.f32 %v418, %v749
        %v908 = vadd.f32 %v419, %v752
        %v909 = vadd.f32 %v420, %v754
        %v910 = vadd.f32 %v421, %v757
        %v911 = vadd.f32 %v422, %v759
        %v912 = vadd.f32 %v423, %v762
        %v913 = vadd.f32 %v424, %v764
        %v914 = vadd.f32 %v425, %v767
        %v915 = vadd.f32 %v426, %v769
        %v916 = vadd.f32 %v427, %v772
        %v917 = vadd.f32 %v428, %v774
        %v918 = vadd.f32 %v429, %v777
        %v919 = vadd.f32 %v430, %v779
        %v920 = vadd.f32 %v431, %v782
        %v921 = vadd.f32 %v432, %v784
        %v922 = vadd.f32 %v433, %v787
        %v923 = vadd.f32 %v434, %v789
        %v924 = vadd.f32 %v435, %v792
        %v925 = vadd.f32 %v436, %v794
        %v926 = vadd.f32 %v437, %v797
        %v927 = vadd.f32 %v438, %v799
        %v928 = vadd.f32 %v439, %v802
        %v929 = vadd.f32 %v440, %v804
        %v930 = vadd.f32 %v441, %v807
        %v931 = vadd.f32 %v442, %v809
        %v932 = vadd.f32 %v443, %v812
        %v933 = vadd.f32 %v444, %v814
        %v934 = vadd.f32 %v445, %v817
        %v935 = vadd.f32 %v446, %v819
        %v936 = vadd.f32 %v447, %v822
        %v937 = vadd.f32 %v448, %v824
        %v938 = vadd.f32 %v449, %v827
        %v939 = vadd.f32 %v450, %v829
        %v940 = vadd.f32 %v451, %v832
        %v941 = vadd.f32 %v452, %v834
        %v942 = vadd.f32 %v453, %v837
        %v943 = vadd.f32 %v454, %v839
        %v944 = vadd.f32 %v455, %v842
        %v945 = vadd.f32 %v456, %v844
        %v946 = vadd.f32 %v457, %v847
        %v947 = vadd.f32 %v458, %v849
        %v948 = vadd.f32 %v459, %v852
        %v949 = vadd.f32 %v460, %v854
        %v950 = vadd.f32 %v461, %v857
        %v951 = vadd.f32 %v462, %v859
        %v952 = vadd.f32 %v463, %v862
        %v953 = vadd.f32 %v464, %v864
        %v954 = vadd.f32 %v465, %v867
        %v955 = vadd.f32 %v466, %v869
        %v956 = vadd.f32 %v467, %v872
        %v957 = vadd.f32 %v468, %v874
        %v958 = vadd.f32 %v469, %v877
        %v959 = vadd.f32 %v470, %v879
        %v960 = vadd.f32 %v471, %v882
        %v961 = vadd.f32 %v472, %v884
        %v962 = vadd.f32 %v473, %v887
        %v963 = vadd.f32 %v474, %v889
        %v964 = vadd.f32 %v475, %v892
        %v965 = vadd.f32 %v476, %v894
        %v966 = vadd.f32 %v477, %v897
        %v967 = vadd.f32 %v478, %v899
        %v968 = vadd.f32 %v479, %v902
        %v969 = vadd.f32 %v480, %v904
        %s970 = scalar_lea.vmem %s249, 64 [#allocation6]
        %v971 = vld [vmem:[%s970] sm:$0xf]
        %v972 = vld [vmem:[%s970 + $0x4] sm:$0xf]
        %v973 = vld [vmem:[%s970 + $0x8] sm:$0xf]
        %v974 = vld [vmem:[%s970 + $0xc] sm:$0xf]
        %v975 = vld [vmem:[%s970 + $0x10] sm:$0xf]
        %v976 = vld [vmem:[%s970 + $0x14] sm:$0xf]
        %v977 = vld [vmem:[%s970 + $0x18] sm:$0xf]
        %v978 = vld [vmem:[%s970 + $0x1c] sm:$0xf]
        %v979 = vld [vmem:[%s970 + $0x20] sm:$0xf]
        %v980 = vld [vmem:[%s970 + $0x24] sm:$0xf]
        %v981 = vld [vmem:[%s970 + $0x28] sm:$0xf]
        %v982 = vld [vmem:[%s970 + $0x2c] sm:$0xf]
        %v983 = vld [vmem:[%s970 + $0x30] sm:$0xf]
        %v984 = vld [vmem:[%s970 + $0x34] sm:$0xf]
        %v985 = vld [vmem:[%s970 + $0x38] sm:$0xf]
        %v986 = vld [vmem:[%s970 + $0x3c] sm:$0xf]
        %v991 = vunpack.c.l.b16 %v409
        %v992 = vunpack.c.l.b16 %v410
        %v993 = vunpack.c.l.b16 %v411
        %v994 = vunpack.c.l.b16 %v412
        %v995 = vpack.c.b16 %v992, %v991
        %v996 = vpack.c.b16 %v994, %v993
        %v1015 = vunpack.c.l.b16 %v971
        %v1016 = vunpack.c.l.b16 %v972
        %v1017 = vunpack.c.l.b16 %v973
        %v1018 = vunpack.c.l.b16 %v974
        %v1019 = vunpack.c.l.b16 %v975
        %v1020 = vunpack.c.l.b16 %v976
        %v1021 = vunpack.c.l.b16 %v977
        %v1022 = vunpack.c.l.b16 %v978
        %v1023 = vunpack.c.l.b16 %v979
        %v1024 = vunpack.c.l.b16 %v980
        %v1025 = vunpack.c.l.b16 %v981
        %v1026 = vunpack.c.l.b16 %v982
        %v1027 = vunpack.c.l.b16 %v983
        %v1028 = vunpack.c.l.b16 %v984
        %v1029 = vunpack.c.l.b16 %v985
        %v1030 = vunpack.c.l.b16 %v986
        %v1031 = vpack.c.b16 %v1016, %v1015
        %v1032 = vpack.c.b16 %v1018, %v1017
        %v1033 = vpack.c.b16 %v1020, %v1019
        %v1034 = vpack.c.b16 %v1022, %v1021
        %v1035 = vpack.c.b16 %v1024, %v1023
        %v1036 = vpack.c.b16 %v1026, %v1025
        %v1037 = vpack.c.b16 %v1028, %v1027
        %v1038 = vpack.c.b16 %v1030, %v1029
        %1047 = vmatpush.bf16.msra.mxu0 %v1038
        %1048 = vmatpush.bf16.msra.mxu0 %v1037
        %1049 = vmatpush.bf16.msra.mxu0 %v1036
        %1050 = vmatpush.bf16.msra.mxu0 %v1035
        %1051 = vmatpush.bf16.msra.mxu0 %v1034
        %1052 = vmatpush.bf16.msra.mxu0 %v1033
        %1053 = vmatpush.bf16.msra.mxu0 %v1032
        %1054 = vmatpush.bf16.msra.mxu0 %v1031
        %1055 = vmatmul.bf16.gmra.mxu0 %v627
        %v1056 = vpop.f32.mrf.mxu0
        %v1057 = vadd.f32 0.0, %v1056
        %v1058 = vpop.f32.mrf.mxu0
        %v1059 = vadd.f32 0.0, %v1058
        %1060 = vmatmul.bf16.gmra.mxu0 %v628
        %v1061 = vpop.f32.mrf.mxu0
        %v1062 = vadd.f32 0.0, %v1061
        %v1063 = vpop.f32.mrf.mxu0
        %v1064 = vadd.f32 0.0, %v1063
        %1065 = vmatmul.bf16.gmra.mxu0 %v629
        %v1066 = vpop.f32.mrf.mxu0
        %v1067 = vadd.f32 0.0, %v1066
        %v1068 = vpop.f32.mrf.mxu0
        %v1069 = vadd.f32 0.0, %v1068
        %1070 = vmatmul.bf16.gmra.mxu0 %v630
        %v1071 = vpop.f32.mrf.mxu0
        %v1072 = vadd.f32 0.0, %v1071
        %v1073 = vpop.f32.mrf.mxu0
        %v1074 = vadd.f32 0.0, %v1073
        %1075 = vmatmul.bf16.gmra.mxu0 %v631
        %v1076 = vpop.f32.mrf.mxu0
        %v1077 = vadd.f32 0.0, %v1076
        %v1078 = vpop.f32.mrf.mxu0
        %v1079 = vadd.f32 0.0, %v1078
        %1080 = vmatmul.bf16.gmra.mxu0 %v632
        %v1081 = vpop.f32.mrf.mxu0
        %v1082 = vadd.f32 0.0, %v1081
        %v1083 = vpop.f32.mrf.mxu0
        %v1084 = vadd.f32 0.0, %v1083
        %1085 = vmatmul.bf16.gmra.mxu0 %v633
        %v1086 = vpop.f32.mrf.mxu0
        %v1087 = vadd.f32 0.0, %v1086
        %v1088 = vpop.f32.mrf.mxu0
        %v1089 = vadd.f32 0.0, %v1088
        %1090 = vmatmul.bf16.gmra.mxu0 %v634
        %v1091 = vpop.f32.mrf.mxu0
        %v1092 = vadd.f32 0.0, %v1091
        %v1093 = vpop.f32.mrf.mxu0
        %v1094 = vadd.f32 0.0, %v1093
        %1095 = vmatmul.bf16.gmra.mxu0 %v635
        %v1096 = vpop.f32.mrf.mxu0
        %v1097 = vadd.f32 0.0, %v1096
        %v1098 = vpop.f32.mrf.mxu0
        %v1099 = vadd.f32 0.0, %v1098
        %1100 = vmatmul.bf16.gmra.mxu0 %v636
        %v1101 = vpop.f32.mrf.mxu0
        %v1102 = vadd.f32 0.0, %v1101
        %v1103 = vpop.f32.mrf.mxu0
        %v1104 = vadd.f32 0.0, %v1103
        %1105 = vmatmul.bf16.gmra.mxu0 %v637
        %v1106 = vpop.f32.mrf.mxu0
        %v1107 = vadd.f32 0.0, %v1106
        %v1108 = vpop.f32.mrf.mxu0
        %v1109 = vadd.f32 0.0, %v1108
        %1110 = vmatmul.bf16.gmra.mxu0 %v638
        %v1111 = vpop.f32.mrf.mxu0
        %v1112 = vadd.f32 0.0, %v1111
        %v1113 = vpop.f32.mrf.mxu0
        %v1114 = vadd.f32 0.0, %v1113
        %1115 = vmatmul.bf16.gmra.mxu0 %v639
        %v1116 = vpop.f32.mrf.mxu0
        %v1117 = vadd.f32 0.0, %v1116
        %v1118 = vpop.f32.mrf.mxu0
        %v1119 = vadd.f32 0.0, %v1118
        %1120 = vmatmul.bf16.gmra.mxu0 %v640
        %v1121 = vpop.f32.mrf.mxu0
        %v1122 = vadd.f32 0.0, %v1121
        %v1123 = vpop.f32.mrf.mxu0
        %v1124 = vadd.f32 0.0, %v1123
        %1125 = vmatmul.bf16.gmra.mxu0 %v641
        %v1126 = vpop.f32.mrf.mxu0
        %v1127 = vadd.f32 0.0, %v1126
        %v1128 = vpop.f32.mrf.mxu0
        %v1129 = vadd.f32 0.0, %v1128
        %1130 = vmatmul.bf16.gmra.mxu0 %v642
        %v1131 = vpop.f32.mrf.mxu0
        %v1132 = vadd.f32 0.0, %v1131
        %v1133 = vpop.f32.mrf.mxu0
        %v1134 = vadd.f32 0.0, %v1133
        %1135 = vmatmul.bf16.gmra.mxu0 %v643
        %v1136 = vpop.f32.mrf.mxu0
        %v1137 = vadd.f32 0.0, %v1136
        %v1138 = vpop.f32.mrf.mxu0
        %v1139 = vadd.f32 0.0, %v1138
        %1140 = vmatmul.bf16.gmra.mxu0 %v644
        %v1141 = vpop.f32.mrf.mxu0
        %v1142 = vadd.f32 0.0, %v1141
        %v1143 = vpop.f32.mrf.mxu0
        %v1144 = vadd.f32 0.0, %v1143
        %1145 = vmatmul.bf16.gmra.mxu0 %v645
        %v1146 = vpop.f32.mrf.mxu0
        %v1147 = vadd.f32 0.0, %v1146
        %v1148 = vpop.f32.mrf.mxu0
        %v1149 = vadd.f32 0.0, %v1148
        %1150 = vmatmul.bf16.gmra.mxu0 %v646
        %v1151 = vpop.f32.mrf.mxu0
        %v1152 = vadd.f32 0.0, %v1151
        %v1153 = vpop.f32.mrf.mxu0
        %v1154 = vadd.f32 0.0, %v1153
        %1155 = vmatmul.bf16.gmra.mxu0 %v647
        %v1156 = vpop.f32.mrf.mxu0
        %v1157 = vadd.f32 0.0, %v1156
        %v1158 = vpop.f32.mrf.mxu0
        %v1159 = vadd.f32 0.0, %v1158
        %1160 = vmatmul.bf16.gmra.mxu0 %v648
        %v1161 = vpop.f32.mrf.mxu0
        %v1162 = vadd.f32 0.0, %v1161
        %v1163 = vpop.f32.mrf.mxu0
        %v1164 = vadd.f32 0.0, %v1163
        %1165 = vmatmul.bf16.gmra.mxu0 %v649
        %v1166 = vpop.f32.mrf.mxu0
        %v1167 = vadd.f32 0.0, %v1166
        %v1168 = vpop.f32.mrf.mxu0
        %v1169 = vadd.f32 0.0, %v1168
        %1170 = vmatmul.bf16.gmra.mxu0 %v650
        %v1171 = vpop.f32.mrf.mxu0
        %v1172 = vadd.f32 0.0, %v1171
        %v1173 = vpop.f32.mrf.mxu0
        %v1174 = vadd.f32 0.0, %v1173
        %1175 = vmatmul.bf16.gmra.mxu0 %v651
        %v1176 = vpop.f32.mrf.mxu0
        %v1177 = vadd.f32 0.0, %v1176
        %v1178 = vpop.f32.mrf.mxu0
        %v1179 = vadd.f32 0.0, %v1178
        %1180 = vmatmul.bf16.gmra.mxu0 %v652
        %v1181 = vpop.f32.mrf.mxu0
        %v1182 = vadd.f32 0.0, %v1181
        %v1183 = vpop.f32.mrf.mxu0
        %v1184 = vadd.f32 0.0, %v1183
        %1185 = vmatmul.bf16.gmra.mxu0 %v653
        %v1186 = vpop.f32.mrf.mxu0
        %v1187 = vadd.f32 0.0, %v1186
        %v1188 = vpop.f32.mrf.mxu0
        %v1189 = vadd.f32 0.0, %v1188
        %1190 = vmatmul.bf16.gmra.mxu0 %v654
        %v1191 = vpop.f32.mrf.mxu0
        %v1192 = vadd.f32 0.0, %v1191
        %v1193 = vpop.f32.mrf.mxu0
        %v1194 = vadd.f32 0.0, %v1193
        %1195 = vmatmul.bf16.gmra.mxu0 %v655
        %v1196 = vpop.f32.mrf.mxu0
        %v1197 = vadd.f32 0.0, %v1196
        %v1198 = vpop.f32.mrf.mxu0
        %v1199 = vadd.f32 0.0, %v1198
        %1200 = vmatmul.bf16.gmra.mxu0 %v656
        %v1201 = vpop.f32.mrf.mxu0
        %v1202 = vadd.f32 0.0, %v1201
        %v1203 = vpop.f32.mrf.mxu0
        %v1204 = vadd.f32 0.0, %v1203
        %1205 = vmatmul.bf16.gmra.mxu0 %v995
        %v1206 = vpop.f32.mrf.mxu0
        %v1207 = vadd.f32 0.0, %v1206
        %v1208 = vpop.f32.mrf.mxu0
        %v1209 = vadd.f32 0.0, %v1208
        %1210 = vmatmul.bf16.gmra.mxu0 %v996
        %v1211 = vpop.f32.mrf.mxu0
        %v1212 = vadd.f32 0.0, %v1211
        %v1213 = vpop.f32.mrf.mxu0
        %v1214 = vadd.f32 0.0, %v1213
        %1215 = vdwg.mxu0
        %v1216 = vadd.f32 %v906, %v1057
        %v1217 = vadd.f32 %v907, %v1059
        %v1218 = vadd.f32 %v908, %v1062
        %v1219 = vadd.f32 %v909, %v1064
        %v1220 = vadd.f32 %v910, %v1067
        %v1221 = vadd.f32 %v911, %v1069
        %v1222 = vadd.f32 %v912, %v1072
        %v1223 = vadd.f32 %v913, %v1074
        %v1224 = vadd.f32 %v914, %v1077
        %v1225 = vadd.f32 %v915, %v1079
        %v1226 = vadd.f32 %v916, %v1082
        %v1227 = vadd.f32 %v917, %v1084
        %v1228 = vadd.f32 %v918, %v1087
        %v1229 = vadd.f32 %v919, %v1089
        %v1230 = vadd.f32 %v920, %v1092
        %v1231 = vadd.f32 %v921, %v1094
        %v1232 = vadd.f32 %v922, %v1097
        %v1233 = vadd.f32 %v923, %v1099
        %v1234 = vadd.f32 %v924, %v1102
        %v1235 = vadd.f32 %v925, %v1104
        %v1236 = vadd.f32 %v926, %v1107
        %v1237 = vadd.f32 %v927, %v1109
        %v1238 = vadd.f32 %v928, %v1112
        %v1239 = vadd.f32 %v929, %v1114
        %v1240 = vadd.f32 %v930, %v1117
        %v1241 = vadd.f32 %v931, %v1119
        %v1242 = vadd.f32 %v932, %v1122
        %v1243 = vadd.f32 %v933, %v1124
        %v1244 = vadd.f32 %v934, %v1127
        %v1245 = vadd.f32 %v935, %v1129
        %v1246 = vadd.f32 %v936, %v1132
        %v1247 = vadd.f32 %v937, %v1134
        %v1248 = vadd.f32 %v938, %v1137
        %v1249 = vadd.f32 %v939, %v1139
        %v1250 = vadd.f32 %v940, %v1142
        %v1251 = vadd.f32 %v941, %v1144
        %v1252 = vadd.f32 %v942, %v1147
        %v1253 = vadd.f32 %v943, %v1149
        %v1254 = vadd.f32 %v944, %v1152
        %v1255 = vadd.f32 %v945, %v1154
        %v1256 = vadd.f32 %v946, %v1157
        %v1257 = vadd.f32 %v947, %v1159
        %v1258 = vadd.f32 %v948, %v1162
        %v1259 = vadd.f32 %v949, %v1164
        %v1260 = vadd.f32 %v950, %v1167
        %v1261 = vadd.f32 %v951, %v1169
        %v1262 = vadd.f32 %v952, %v1172
        %v1263 = vadd.f32 %v953, %v1174
        %v1264 = vadd.f32 %v954, %v1177
        %v1265 = vadd.f32 %v955, %v1179
        %v1266 = vadd.f32 %v956, %v1182
        %v1267 = vadd.f32 %v957, %v1184
        %v1268 = vadd.f32 %v958, %v1187
        %v1269 = vadd.f32 %v959, %v1189
        %v1270 = vadd.f32 %v960, %v1192
        %v1271 = vadd.f32 %v961, %v1194
        %v1272 = vadd.f32 %v962, %v1197
        %v1273 = vadd.f32 %v963, %v1199
        %v1274 = vadd.f32 %v964, %v1202
        %v1275 = vadd.f32 %v965, %v1204
        %v1276 = vadd.f32 %v966, %v1207
        %v1277 = vadd.f32 %v967, %v1209
        %v1278 = vadd.f32 %v968, %v1212
        %v1279 = vadd.f32 %v969, %v1214
        %s1280 = scalar_lea.vmem %s249, 128 [#allocation6]
        %v1281 = vld [vmem:[%s1280] sm:$0xf]
        %v1282 = vld [vmem:[%s1280 + $0x4] sm:$0xf]
        %v1283 = vld [vmem:[%s1280 + $0x8] sm:$0xf]
        %v1284 = vld [vmem:[%s1280 + $0xc] sm:$0xf]
        %v1285 = vld [vmem:[%s1280 + $0x10] sm:$0xf]
        %v1286 = vld [vmem:[%s1280 + $0x14] sm:$0xf]
        %v1287 = vld [vmem:[%s1280 + $0x18] sm:$0xf]
        %v1288 = vld [vmem:[%s1280 + $0x1c] sm:$0xf]
        %v1289 = vld [vmem:[%s1280 + $0x20] sm:$0xf]
        %v1290 = vld [vmem:[%s1280 + $0x24] sm:$0xf]
        %v1291 = vld [vmem:[%s1280 + $0x28] sm:$0xf]
        %v1292 = vld [vmem:[%s1280 + $0x2c] sm:$0xf]
        %v1293 = vld [vmem:[%s1280 + $0x30] sm:$0xf]
        %v1294 = vld [vmem:[%s1280 + $0x34] sm:$0xf]
        %v1295 = vld [vmem:[%s1280 + $0x38] sm:$0xf]
        %v1296 = vld [vmem:[%s1280 + $0x3c] sm:$0xf]
        %v1301 = vunpack.c.l.b16 %v413
        %v1302 = vunpack.c.l.b16 %v414
        %v1303 = vunpack.c.l.b16 %v415
        %v1304 = vunpack.c.l.b16 %v416
        %v1305 = vpack.c.b16 %v1302, %v1301
        %v1306 = vpack.c.b16 %v1304, %v1303
        %v1325 = vunpack.c.l.b16 %v1281
        %v1326 = vunpack.c.l.b16 %v1282
        %v1327 = vunpack.c.l.b16 %v1283
        %v1328 = vunpack.c.l.b16 %v1284
        %v1329 = vunpack.c.l.b16 %v1285
        %v1330 = vunpack.c.l.b16 %v1286
        %v1331 = vunpack.c.l.b16 %v1287
        %v1332 = vunpack.c.l.b16 %v1288
        %v1333 = vunpack.c.l.b16 %v1289
        %v1334 = vunpack.c.l.b16 %v1290
        %v1335 = vunpack.c.l.b16 %v1291
        %v1336 = vunpack.c.l.b16 %v1292
        %v1337 = vunpack.c.l.b16 %v1293
        %v1338 = vunpack.c.l.b16 %v1294
        %v1339 = vunpack.c.l.b16 %v1295
        %v1340 = vunpack.c.l.b16 %v1296
        %v1341 = vpack.c.b16 %v1326, %v1325
        %v1342 = vpack.c.b16 %v1328, %v1327
        %v1343 = vpack.c.b16 %v1330, %v1329
        %v1344 = vpack.c.b16 %v1332, %v1331
        %v1345 = vpack.c.b16 %v1334, %v1333
        %v1346 = vpack.c.b16 %v1336, %v1335
        %v1347 = vpack.c.b16 %v1338, %v1337
        %v1348 = vpack.c.b16 %v1340, %v1339
        %1357 = vmatpush.bf16.msra.mxu0 %v1348
        %1358 = vmatpush.bf16.msra.mxu0 %v1347
        %1359 = vmatpush.bf16.msra.mxu0 %v1346
        %1360 = vmatpush.bf16.msra.mxu0 %v1345
        %1361 = vmatpush.bf16.msra.mxu0 %v1344
        %1362 = vmatpush.bf16.msra.mxu0 %v1343
        %1363 = vmatpush.bf16.msra.mxu0 %v1342
        %1364 = vmatpush.bf16.msra.mxu0 %v1341
        %1365 = vmatmul.bf16.gmra.mxu0 %v629
        %v1366 = vpop.f32.mrf.mxu0
        %v1367 = vadd.f32 0.0, %v1366
        %v1368 = vpop.f32.mrf.mxu0
        %v1369 = vadd.f32 0.0, %v1368
        %1370 = vmatmul.bf16.gmra.mxu0 %v630
        %v1371 = vpop.f32.mrf.mxu0
        %v1372 = vadd.f32 0.0, %v1371
        %v1373 = vpop.f32.mrf.mxu0
        %v1374 = vadd.f32 0.0, %v1373
        %1375 = vmatmul.bf16.gmra.mxu0 %v631
        %v1376 = vpop.f32.mrf.mxu0
        %v1377 = vadd.f32 0.0, %v1376
        %v1378 = vpop.f32.mrf.mxu0
        %v1379 = vadd.f32 0.0, %v1378
        %1380 = vmatmul.bf16.gmra.mxu0 %v632
        %v1381 = vpop.f32.mrf.mxu0
        %v1382 = vadd.f32 0.0, %v1381
        %v1383 = vpop.f32.mrf.mxu0
        %v1384 = vadd.f32 0.0, %v1383
        %1385 = vmatmul.bf16.gmra.mxu0 %v633
        %v1386 = vpop.f32.mrf.mxu0
        %v1387 = vadd.f32 0.0, %v1386
        %v1388 = vpop.f32.mrf.mxu0
        %v1389 = vadd.f32 0.0, %v1388
        %1390 = vmatmul.bf16.gmra.mxu0 %v634
        %v1391 = vpop.f32.mrf.mxu0
        %v1392 = vadd.f32 0.0, %v1391
        %v1393 = vpop.f32.mrf.mxu0
        %v1394 = vadd.f32 0.0, %v1393
        %1395 = vmatmul.bf16.gmra.mxu0 %v635
        %v1396 = vpop.f32.mrf.mxu0
        %v1397 = vadd.f32 0.0, %v1396
        %v1398 = vpop.f32.mrf.mxu0
        %v1399 = vadd.f32 0.0, %v1398
        %1400 = vmatmul.bf16.gmra.mxu0 %v636
        %v1401 = vpop.f32.mrf.mxu0
        %v1402 = vadd.f32 0.0, %v1401
        %v1403 = vpop.f32.mrf.mxu0
        %v1404 = vadd.f32 0.0, %v1403
        %1405 = vmatmul.bf16.gmra.mxu0 %v637
        %v1406 = vpop.f32.mrf.mxu0
        %v1407 = vadd.f32 0.0, %v1406
        %v1408 = vpop.f32.mrf.mxu0
        %v1409 = vadd.f32 0.0, %v1408
        %1410 = vmatmul.bf16.gmra.mxu0 %v638
        %v1411 = vpop.f32.mrf.mxu0
        %v1412 = vadd.f32 0.0, %v1411
        %v1413 = vpop.f32.mrf.mxu0
        %v1414 = vadd.f32 0.0, %v1413
        %1415 = vmatmul.bf16.gmra.mxu0 %v639
        %v1416 = vpop.f32.mrf.mxu0
        %v1417 = vadd.f32 0.0, %v1416
        %v1418 = vpop.f32.mrf.mxu0
        %v1419 = vadd.f32 0.0, %v1418
        %1420 = vmatmul.bf16.gmra.mxu0 %v640
        %v1421 = vpop.f32.mrf.mxu0
        %v1422 = vadd.f32 0.0, %v1421
        %v1423 = vpop.f32.mrf.mxu0
        %v1424 = vadd.f32 0.0, %v1423
        %1425 = vmatmul.bf16.gmra.mxu0 %v641
        %v1426 = vpop.f32.mrf.mxu0
        %v1427 = vadd.f32 0.0, %v1426
        %v1428 = vpop.f32.mrf.mxu0
        %v1429 = vadd.f32 0.0, %v1428
        %1430 = vmatmul.bf16.gmra.mxu0 %v642
        %v1431 = vpop.f32.mrf.mxu0
        %v1432 = vadd.f32 0.0, %v1431
        %v1433 = vpop.f32.mrf.mxu0
        %v1434 = vadd.f32 0.0, %v1433
        %1435 = vmatmul.bf16.gmra.mxu0 %v643
        %v1436 = vpop.f32.mrf.mxu0
        %v1437 = vadd.f32 0.0, %v1436
        %v1438 = vpop.f32.mrf.mxu0
        %v1439 = vadd.f32 0.0, %v1438
        %1440 = vmatmul.bf16.gmra.mxu0 %v644
        %v1441 = vpop.f32.mrf.mxu0
        %v1442 = vadd.f32 0.0, %v1441
        %v1443 = vpop.f32.mrf.mxu0
        %v1444 = vadd.f32 0.0, %v1443
        %1445 = vmatmul.bf16.gmra.mxu0 %v645
        %v1446 = vpop.f32.mrf.mxu0
        %v1447 = vadd.f32 0.0, %v1446
        %v1448 = vpop.f32.mrf.mxu0
        %v1449 = vadd.f32 0.0, %v1448
        %1450 = vmatmul.bf16.gmra.mxu0 %v646
        %v1451 = vpop.f32.mrf.mxu0
        %v1452 = vadd.f32 0.0, %v1451
        %v1453 = vpop.f32.mrf.mxu0
        %v1454 = vadd.f32 0.0, %v1453
        %1455 = vmatmul.bf16.gmra.mxu0 %v647
        %v1456 = vpop.f32.mrf.mxu0
        %v1457 = vadd.f32 0.0, %v1456
        %v1458 = vpop.f32.mrf.mxu0
        %v1459 = vadd.f32 0.0, %v1458
        %1460 = vmatmul.bf16.gmra.mxu0 %v648
        %v1461 = vpop.f32.mrf.mxu0
        %v1462 = vadd.f32 0.0, %v1461
        %v1463 = vpop.f32.mrf.mxu0
        %v1464 = vadd.f32 0.0, %v1463
        %1465 = vmatmul.bf16.gmra.mxu0 %v649
        %v1466 = vpop.f32.mrf.mxu0
        %v1467 = vadd.f32 0.0, %v1466
        %v1468 = vpop.f32.mrf.mxu0
        %v1469 = vadd.f32 0.0, %v1468
        %1470 = vmatmul.bf16.gmra.mxu0 %v650
        %v1471 = vpop.f32.mrf.mxu0
        %v1472 = vadd.f32 0.0, %v1471
        %v1473 = vpop.f32.mrf.mxu0
        %v1474 = vadd.f32 0.0, %v1473
        %1475 = vmatmul.bf16.gmra.mxu0 %v651
        %v1476 = vpop.f32.mrf.mxu0
        %v1477 = vadd.f32 0.0, %v1476
        %v1478 = vpop.f32.mrf.mxu0
        %v1479 = vadd.f32 0.0, %v1478
        %1480 = vmatmul.bf16.gmra.mxu0 %v652
        %v1481 = vpop.f32.mrf.mxu0
        %v1482 = vadd.f32 0.0, %v1481
        %v1483 = vpop.f32.mrf.mxu0
        %v1484 = vadd.f32 0.0, %v1483
        %1485 = vmatmul.bf16.gmra.mxu0 %v653
        %v1486 = vpop.f32.mrf.mxu0
        %v1487 = vadd.f32 0.0, %v1486
        %v1488 = vpop.f32.mrf.mxu0
        %v1489 = vadd.f32 0.0, %v1488
        %1490 = vmatmul.bf16.gmra.mxu0 %v654
        %v1491 = vpop.f32.mrf.mxu0
        %v1492 = vadd.f32 0.0, %v1491
        %v1493 = vpop.f32.mrf.mxu0
        %v1494 = vadd.f32 0.0, %v1493
        %1495 = vmatmul.bf16.gmra.mxu0 %v655
        %v1496 = vpop.f32.mrf.mxu0
        %v1497 = vadd.f32 0.0, %v1496
        %v1498 = vpop.f32.mrf.mxu0
        %v1499 = vadd.f32 0.0, %v1498
        %1500 = vmatmul.bf16.gmra.mxu0 %v656
        %v1501 = vpop.f32.mrf.mxu0
        %v1502 = vadd.f32 0.0, %v1501
        %v1503 = vpop.f32.mrf.mxu0
        %v1504 = vadd.f32 0.0, %v1503
        %1505 = vmatmul.bf16.gmra.mxu0 %v995
        %v1506 = vpop.f32.mrf.mxu0
        %v1507 = vadd.f32 0.0, %v1506
        %v1508 = vpop.f32.mrf.mxu0
        %v1509 = vadd.f32 0.0, %v1508
        %1510 = vmatmul.bf16.gmra.mxu0 %v996
        %v1511 = vpop.f32.mrf.mxu0
        %v1512 = vadd.f32 0.0, %v1511
        %v1513 = vpop.f32.mrf.mxu0
        %v1514 = vadd.f32 0.0, %v1513
        %1515 = vmatmul.bf16.gmra.mxu0 %v1305
        %v1516 = vpop.f32.mrf.mxu0
        %v1517 = vadd.f32 0.0, %v1516
        %v1518 = vpop.f32.mrf.mxu0
        %v1519 = vadd.f32 0.0, %v1518
        %1520 = vmatmul.bf16.gmra.mxu0 %v1306
        %v1521 = vpop.f32.mrf.mxu0
        %v1522 = vadd.f32 0.0, %v1521
        %v1523 = vpop.f32.mrf.mxu0
        %v1524 = vadd.f32 0.0, %v1523
        %1525 = vdwg.mxu0
        %v1526 = vadd.f32 %v1216, %v1367
        %v1527 = vadd.f32 %v1217, %v1369
        %v1528 = vadd.f32 %v1218, %v1372
        %v1529 = vadd.f32 %v1219, %v1374
        %v1530 = vadd.f32 %v1220, %v1377
        %v1531 = vadd.f32 %v1221, %v1379
        %v1532 = vadd.f32 %v1222, %v1382
        %v1533 = vadd.f32 %v1223, %v1384
        %v1534 = vadd.f32 %v1224, %v1387
        %v1535 = vadd.f32 %v1225, %v1389
        %v1536 = vadd.f32 %v1226, %v1392
        %v1537 = vadd.f32 %v1227, %v1394
        %v1538 = vadd.f32 %v1228, %v1397
        %v1539 = vadd.f32 %v1229, %v1399
        %v1540 = vadd.f32 %v1230, %v1402
        %v1541 = vadd.f32 %v1231, %v1404
        %v1542 = vadd.f32 %v1232, %v1407
        %v1543 = vadd.f32 %v1233, %v1409
        %v1544 = vadd.f32 %v1234, %v1412
        %v1545 = vadd.f32 %v1235, %v1414
        %v1546 = vadd.f32 %v1236, %v1417
        %v1547 = vadd.f32 %v1237, %v1419
        %v1548 = vadd.f32 %v1238, %v1422
        %v1549 = vadd.f32 %v1239, %v1424
        %v1550 = vadd.f32 %v1240, %v1427
        %v1551 = vadd.f32 %v1241, %v1429
        %v1552 = vadd.f32 %v1242, %v1432
        %v1553 = vadd.f32 %v1243, %v1434
        %v1554 = vadd.f32 %v1244, %v1437
        %v1555 = vadd.f32 %v1245, %v1439
        %v1556 = vadd.f32 %v1246, %v1442
        %v1557 = vadd.f32 %v1247, %v1444
        %v1558 = vadd.f32 %v1248, %v1447
        %v1559 = vadd.f32 %v1249, %v1449
        %v1560 = vadd.f32 %v1250, %v1452
        %v1561 = vadd.f32 %v1251, %v1454
        %v1562 = vadd.f32 %v1252, %v1457
        %v1563 = vadd.f32 %v1253, %v1459
        %v1564 = vadd.f32 %v1254, %v1462
        %v1565 = vadd.f32 %v1255, %v1464
        %v1566 = vadd.f32 %v1256, %v1467
        %v1567 = vadd.f32 %v1257, %v1469
        %v1568 = vadd.f32 %v1258, %v1472
        %v1569 = vadd.f32 %v1259, %v1474
        %v1570 = vadd.f32 %v1260, %v1477
        %v1571 = vadd.f32 %v1261, %v1479
        %v1572 = vadd.f32 %v1262, %v1482
        %v1573 = vadd.f32 %v1263, %v1484
        %v1574 = vadd.f32 %v1264, %v1487
        %v1575 = vadd.f32 %v1265, %v1489
        %v1576 = vadd.f32 %v1266, %v1492
        %v1577 = vadd.f32 %v1267, %v1494
        %v1578 = vadd.f32 %v1268, %v1497
        %v1579 = vadd.f32 %v1269, %v1499
        %v1580 = vadd.f32 %v1270, %v1502
        %v1581 = vadd.f32 %v1271, %v1504
        %v1582 = vadd.f32 %v1272, %v1507
        %v1583 = vadd.f32 %v1273, %v1509
        %v1584 = vadd.f32 %v1274, %v1512
        %v1585 = vadd.f32 %v1275, %v1514
        %v1586 = vadd.f32 %v1276, %v1517
        %v1587 = vadd.f32 %v1277, %v1519
        %v1588 = vadd.f32 %v1278, %v1522
        %v1589 = vadd.f32 %v1279, %v1524
        %1590 = vst [vmem:[#allocation2] sm:$0xff] %v1526
        %1591 = vst [vmem:[#allocation2 + $0x8] sm:$0xff] %v1527
        %1592 = vst [vmem:[#allocation2 + $0x10] sm:$0xff] %v1528
        %1593 = vst [vmem:[#allocation2 + $0x18] sm:$0xff] %v1529
        %1594 = vst [vmem:[#allocation2 + $0x20] sm:$0xff] %v1530
        %1595 = vst [vmem:[#allocation2 + $0x28] sm:$0xff] %v1531
        %1596 = vst [vmem:[#allocation2 + $0x30] sm:$0xff] %v1532
        %1597 = vst [vmem:[#allocation2 + $0x38] sm:$0xff] %v1533
        %1598 = vst [vmem:[#allocation2 + $0x40] sm:$0xff] %v1534
        %1599 = vst [vmem:[#allocation2 + $0x48] sm:$0xff] %v1535
        %1600 = vst [vmem:[#allocation2 + $0x50] sm:$0xff] %v1536
        %1601 = vst [vmem:[#allocation2 + $0x58] sm:$0xff] %v1537
        %1602 = vst [vmem:[#allocation2 + $0x60] sm:$0xff] %v1538
        %1603 = vst [vmem:[#allocation2 + $0x68] sm:$0xff] %v1539
        %1604 = vst [vmem:[#allocation2 + $0x70] sm:$0xff] %v1540
        %1605 = vst [vmem:[#allocation2 + $0x78] sm:$0xff] %v1541
        %1606 = vst [vmem:[#allocation2 + $0x80] sm:$0xff] %v1542
        %1607 = vst [vmem:[#allocation2 + $0x88] sm:$0xff] %v1543
        %1608 = vst [vmem:[#allocation2 + $0x90] sm:$0xff] %v1544
        %1609 = vst [vmem:[#allocation2 + $0x98] sm:$0xff] %v1545
        %1610 = vst [vmem:[#allocation2 + $0xa0] sm:$0xff] %v1546
        %1611 = vst [vmem:[#allocation2 + $0xa8] sm:$0xff] %v1547
        %1612 = vst [vmem:[#allocation2 + $0xb0] sm:$0xff] %v1548
        %1613 = vst [vmem:[#allocation2 + $0xb8] sm:$0xff] %v1549
        %1614 = vst [vmem:[#allocation2 + $0xc0] sm:$0xff] %v1550
        %1615 = vst [vmem:[#allocation2 + $0xc8] sm:$0xff] %v1551
        %1616 = vst [vmem:[#allocation2 + $0xd0] sm:$0xff] %v1552
        %1617 = vst [vmem:[#allocation2 + $0xd8] sm:$0xff] %v1553
        %1618 = vst [vmem:[#allocation2 + $0xe0] sm:$0xff] %v1554
        %1619 = vst [vmem:[#allocation2 + $0xe8] sm:$0xff] %v1555
        %1620 = vst [vmem:[#allocation2 + $0xf0] sm:$0xff] %v1556
        %1621 = vst [vmem:[#allocation2 + $0xf8] sm:$0xff] %v1557
        %1622 = vst [vmem:[#allocation2 + $0x100] sm:$0xff] %v1558
        %1623 = vst [vmem:[#allocation2 + $0x108] sm:$0xff] %v1559
        %1624 = vst [vmem:[#allocation2 + $0x110] sm:$0xff] %v1560
        %1625 = vst [vmem:[#allocation2 + $0x118] sm:$0xff] %v1561
        %1626 = vst [vmem:[#allocation2 + $0x120] sm:$0xff] %v1562
        %1627 = vst [vmem:[#allocation2 + $0x128] sm:$0xff] %v1563
        %1628 = vst [vmem:[#allocation2 + $0x130] sm:$0xff] %v1564
        %1629 = vst [vmem:[#allocation2 + $0x138] sm:$0xff] %v1565
        %1630 = vst [vmem:[#allocation2 + $0x140] sm:$0xff] %v1566
        %1631 = vst [vmem:[#allocation2 + $0x148] sm:$0xff] %v1567
        %1632 = vst [vmem:[#allocation2 + $0x150] sm:$0xff] %v1568
        %1633 = vst [vmem:[#allocation2 + $0x158] sm:$0xff] %v1569
        %1634 = vst [vmem:[#allocation2 + $0x160] sm:$0xff] %v1570
        %1635 = vst [vmem:[#allocation2 + $0x168] sm:$0xff] %v1571
        %1636 = vst [vmem:[#allocation2 + $0x170] sm:$0xff] %v1572
        %1637 = vst [vmem:[#allocation2 + $0x178] sm:$0xff] %v1573
        %1638 = vst [vmem:[#allocation2 + $0x180] sm:$0xff] %v1574
        %1639 = vst [vmem:[#allocation2 + $0x188] sm:$0xff] %v1575
        %1640 = vst [vmem:[#allocation2 + $0x190] sm:$0xff] %v1576
        %1641 = vst [vmem:[#allocation2 + $0x198] sm:$0xff] %v1577
        %1642 = vst [vmem:[#allocation2 + $0x1a0] sm:$0xff] %v1578
        %1643 = vst [vmem:[#allocation2 + $0x1a8] sm:$0xff] %v1579
        %1644 = vst [vmem:[#allocation2 + $0x1b0] sm:$0xff] %v1580
        %1645 = vst [vmem:[#allocation2 + $0x1b8] sm:$0xff] %v1581
        %1646 = vst [vmem:[#allocation2 + $0x1c0] sm:$0xff] %v1582
        %1647 = vst [vmem:[#allocation2 + $0x1c8] sm:$0xff] %v1583
        %1648 = vst [vmem:[#allocation2 + $0x1d0] sm:$0xff] %v1584
        %1649 = vst [vmem:[#allocation2 + $0x1d8] sm:$0xff] %v1585
        %1650 = vst [vmem:[#allocation2 + $0x1e0] sm:$0xff] %v1586
        %1651 = vst [vmem:[#allocation2 + $0x1e8] sm:$0xff] %v1587
        %1652 = vst [vmem:[#allocation2 + $0x1f0] sm:$0xff] %v1588
        %1653 = vst [vmem:[#allocation2 + $0x1f8] sm:$0xff] %v1589
        %p1654 = scmp.eq.s32.totalorder %s29, 2
        // Predicated region
        $region41: #{tpu_custom_call.1} parent=27 // pred_check
          %p1655 = pneg %p1654
        $region42: #{tpu_custom_call.1} parent=27 // pred_check_branch
          %1657 = sbr.rel (%p1655) target = $region44
        $region43: #{tpu_custom_call.1} parent=27 // pred_region
          %v1658 = vpack.c.bf16 %v1526, %v1526
          %v1659 = vpack.c.bf16 %v1527, %v1527
          %v1660 = vpack.c.bf16 %v1528, %v1528
          %v1661 = vpack.c.bf16 %v1529, %v1529
          %v1662 = vpack.c.bf16 %v1530, %v1530
          %v1663 = vpack.c.bf16 %v1531, %v1531
          %v1664 = vpack.c.bf16 %v1532, %v1532
          %v1665 = vpack.c.bf16 %v1533, %v1533
          %v1666 = vpack.c.bf16 %v1534, %v1534
          %v1667 = vpack.c.bf16 %v1535, %v1535
          %v1668 = vpack.c.bf16 %v1536, %v1536
          %v1669 = vpack.c.bf16 %v1537, %v1537
          %v1670 = vpack.c.bf16 %v1538, %v1538
          %v1671 = vpack.c.bf16 %v1539, %v1539
          %v1672 = vpack.c.bf16 %v1540, %v1540
          %v1673 = vpack.c.bf16 %v1541, %v1541
          %v1674 = vpack.c.bf16 %v1542, %v1542
          %v1675 = vpack.c.bf16 %v1543, %v1543
          %v1676 = vpack.c.bf16 %v1544, %v1544
          %v1677 = vpack.c.bf16 %v1545, %v1545
          %v1678 = vpack.c.bf16 %v1546, %v1546
          %v1679 = vpack.c.bf16 %v1547, %v1547
          %v1680 = vpack.c.bf16 %v1548, %v1548
          %v1681 = vpack.c.bf16 %v1549, %v1549
          %v1682 = vpack.c.bf16 %v1550, %v1550
          %v1683 = vpack.c.bf16 %v1551, %v1551
          %v1684 = vpack.c.bf16 %v1552, %v1552
          %v1685 = vpack.c.bf16 %v1553, %v1553
          %v1686 = vpack.c.bf16 %v1554, %v1554
          %v1687 = vpack.c.bf16 %v1555, %v1555
          %v1688 = vpack.c.bf16 %v1556, %v1556
          %v1689 = vpack.c.bf16 %v1557, %v1557
          %v1690 = vpack.c.bf16 %v1558, %v1558
          %v1691 = vpack.c.bf16 %v1559, %v1559
          %v1692 = vpack.c.bf16 %v1560, %v1560
          %v1693 = vpack.c.bf16 %v1561, %v1561
          %v1694 = vpack.c.bf16 %v1562, %v1562
          %v1695 = vpack.c.bf16 %v1563, %v1563
          %v1696 = vpack.c.bf16 %v1564, %v1564
          %v1697 = vpack.c.bf16 %v1565, %v1565
          %v1698 = vpack.c.bf16 %v1566, %v1566
          %v1699 = vpack.c.bf16 %v1567, %v1567
          %v1700 = vpack.c.bf16 %v1568, %v1568
          %v1701 = vpack.c.bf16 %v1569, %v1569
          %v1702 = vpack.c.bf16 %v1570, %v1570
          %v1703 = vpack.c.bf16 %v1571, %v1571
          %v1704 = vpack.c.bf16 %v1572, %v1572
          %v1705 = vpack.c.bf16 %v1573, %v1573
          %v1706 = vpack.c.bf16 %v1574, %v1574
          %v1707 = vpack.c.bf16 %v1575, %v1575
          %v1708 = vpack.c.bf16 %v1576, %v1576
          %v1709 = vpack.c.bf16 %v1577, %v1577
          %v1710 = vpack.c.bf16 %v1578, %v1578
          %v1711 = vpack.c.bf16 %v1579, %v1579
          %v1712 = vpack.c.bf16 %v1580, %v1580
          %v1713 = vpack.c.bf16 %v1581, %v1581
          %v1714 = vpack.c.bf16 %v1582, %v1582
          %v1715 = vpack.c.bf16 %v1583, %v1583
          %v1716 = vpack.c.bf16 %v1584, %v1584
          %v1717 = vpack.c.bf16 %v1585, %v1585
          %v1718 = vpack.c.bf16 %v1586, %v1586
          %v1719 = vpack.c.bf16 %v1587, %v1587
          %v1720 = vpack.c.bf16 %v1588, %v1588
          %v1721 = vpack.c.bf16 %v1589, %v1589
          %1722 = vst [vmem:[#allocation8] sm:$0xf] %v1658
          %1723 = vst [vmem:[#allocation8 + $0x4] sm:$0xf] %v1659
          %1724 = vst [vmem:[#allocation8 + $0x8] sm:$0xf] %v1660
          %1725 = vst [vmem:[#allocation8 + $0xc] sm:$0xf] %v1661
          %1726 = vst [vmem:[#allocation8 + $0x10] sm:$0xf] %v1662
          %1727 = vst [vmem:[#allocation8 + $0x14] sm:$0xf] %v1663
          %1728 = vst [vmem:[#allocation8 + $0x18] sm:$0xf] %v1664
          %1729 = vst [vmem:[#allocation8 + $0x1c] sm:$0xf] %v1665
          %1730 = vst [vmem:[#allocation8 + $0x20] sm:$0xf] %v1666
          %1731 = vst [vmem:[#allocation8 + $0x24] sm:$0xf] %v1667
          %1732 = vst [vmem:[#allocation8 + $0x28] sm:$0xf] %v1668
          %1733 = vst [vmem:[#allocation8 + $0x2c] sm:$0xf] %v1669
          %1734 = vst [vmem:[#allocation8 + $0x30] sm:$0xf] %v1670
          %1735 = vst [vmem:[#allocation8 + $0x34] sm:$0xf] %v1671
          %1736 = vst [vmem:[#allocation8 + $0x38] sm:$0xf] %v1672
          %1737 = vst [vmem:[#allocation8 + $0x3c] sm:$0xf] %v1673
          %1738 = vst [vmem:[#allocation8 + $0x40] sm:$0xf] %v1674
          %1739 = vst [vmem:[#allocation8 + $0x44] sm:$0xf] %v1675
          %1740 = vst [vmem:[#allocation8 + $0x48] sm:$0xf] %v1676
          %1741 = vst [vmem:[#allocation8 + $0x4c] sm:$0xf] %v1677
          %1742 = vst [vmem:[#allocation8 + $0x50] sm:$0xf] %v1678
          %1743 = vst [vmem:[#allocation8 + $0x54] sm:$0xf] %v1679
          %1744 = vst [vmem:[#allocation8 + $0x58] sm:$0xf] %v1680
          %1745 = vst [vmem:[#allocation8 + $0x5c] sm:$0xf] %v1681
          %1746 = vst [vmem:[#allocation8 + $0x60] sm:$0xf] %v1682
          %1747 = vst [vmem:[#allocation8 + $0x64] sm:$0xf] %v1683
          %1748 = vst [vmem:[#allocation8 + $0x68] sm:$0xf] %v1684
          %1749 = vst [vmem:[#allocation8 + $0x6c] sm:$0xf] %v1685
          %1750 = vst [vmem:[#allocation8 + $0x70] sm:$0xf] %v1686
          %1751 = vst [vmem:[#allocation8 + $0x74] sm:$0xf] %v1687
          %1752 = vst [vmem:[#allocation8 + $0x78] sm:$0xf] %v1688
          %1753 = vst [vmem:[#allocation8 + $0x7c] sm:$0xf] %v1689
          %1754 = vst [vmem:[#allocation8 + $0x80] sm:$0xf] %v1690
          %1755 = vst [vmem:[#allocation8 + $0x84] sm:$0xf] %v1691
          %1756 = vst [vmem:[#allocation8 + $0x88] sm:$0xf] %v1692
          %1757 = vst [vmem:[#allocation8 + $0x8c] sm:$0xf] %v1693
          %1758 = vst [vmem:[#allocation8 + $0x90] sm:$0xf] %v1694
          %1759 = vst [vmem:[#allocation8 + $0x94] sm:$0xf] %v1695
          %1760 = vst [vmem:[#allocation8 + $0x98] sm:$0xf] %v1696
          %1761 = vst [vmem:[#allocation8 + $0x9c] sm:$0xf] %v1697
          %1762 = vst [vmem:[#allocation8 + $0xa0] sm:$0xf] %v1698
          %1763 = vst [vmem:[#allocation8 + $0xa4] sm:$0xf] %v1699
          %1764 = vst [vmem:[#allocation8 + $0xa8] sm:$0xf] %v1700
          %1765 = vst [vmem:[#allocation8 + $0xac] sm:$0xf] %v1701
          %1766 = vst [vmem:[#allocation8 + $0xb0] sm:$0xf] %v1702
          %1767 = vst [vmem:[#allocation8 + $0xb4] sm:$0xf] %v1703
          %1768 = vst [vmem:[#allocation8 + $0xb8] sm:$0xf] %v1704
          %1769 = vst [vmem:[#allocation8 + $0xbc] sm:$0xf] %v1705
          %1770 = vst [vmem:[#allocation8 + $0xc0] sm:$0xf] %v1706
          %1771 = vst [vmem:[#allocation8 + $0xc4] sm:$0xf] %v1707
          %1772 = vst [vmem:[#allocation8 + $0xc8] sm:$0xf] %v1708
          %1773 = vst [vmem:[#allocation8 + $0xcc] sm:$0xf] %v1709
          %1774 = vst [vmem:[#allocation8 + $0xd0] sm:$0xf] %v1710
          %1775 = vst [vmem:[#allocation8 + $0xd4] sm:$0xf] %v1711
          %1776 = vst [vmem:[#allocation8 + $0xd8] sm:$0xf] %v1712
          %1777 = vst [vmem:[#allocation8 + $0xdc] sm:$0xf] %v1713
          %1778 = vst [vmem:[#allocation8 + $0xe0] sm:$0xf] %v1714
          %1779 = vst [vmem:[#allocation8 + $0xe4] sm:$0xf] %v1715
          %1780 = vst [vmem:[#allocation8 + $0xe8] sm:$0xf] %v1716
          %1781 = vst [vmem:[#allocation8 + $0xec] sm:$0xf] %v1717
          %1782 = vst [vmem:[#allocation8 + $0xf0] sm:$0xf] %v1718
          %1783 = vst [vmem:[#allocation8 + $0xf4] sm:$0xf] %v1719
          %1784 = vst [vmem:[#allocation8 + $0xf8] sm:$0xf] %v1720
          %1785 = vst [vmem:[#allocation8 + $0xfc] sm:$0xf] %v1721
          %v1786 = vadd.f32 %v1526, %v1527
          %v1787 = vadd.f32 %v1786, %v1528
          %v1788 = vadd.f32 %v1787, %v1529
          %v1789 = vadd.f32 %v1788, %v1530
          %v1790 = vadd.f32 %v1789, %v1531
          %v1791 = vadd.f32 %v1790, %v1532
          %v1792 = vadd.f32 %v1791, %v1533
          %v1793 = vadd.f32 %v1792, %v1534
          %v1794 = vadd.f32 %v1793, %v1535
          %v1795 = vadd.f32 %v1794, %v1536
          %v1796 = vadd.f32 %v1795, %v1537
          %v1797 = vadd.f32 %v1796, %v1538
          %v1798 = vadd.f32 %v1797, %v1539
          %v1799 = vadd.f32 %v1798, %v1540
          %v1800 = vadd.f32 %v1799, %v1541
          %v1801 = vadd.f32 %v1800, %v1542
          %v1802 = vadd.f32 %v1801, %v1543
          %v1803 = vadd.f32 %v1802, %v1544
          %v1804 = vadd.f32 %v1803, %v1545
          %v1805 = vadd.f32 %v1804, %v1546
          %v1806 = vadd.f32 %v1805, %v1547
          %v1807 = vadd.f32 %v1806, %v1548
          %v1808 = vadd.f32 %v1807, %v1549
          %v1809 = vadd.f32 %v1808, %v1550
          %v1810 = vadd.f32 %v1809, %v1551
          %v1811 = vadd.f32 %v1810, %v1552
          %v1812 = vadd.f32 %v1811, %v1553
          %v1813 = vadd.f32 %v1812, %v1554
          %v1814 = vadd.f32 %v1813, %v1555
          %v1815 = vadd.f32 %v1814, %v1556
          %v1816 = vadd.f32 %v1815, %v1557
          %v1817 = vadd.f32 %v1816, %v1558
          %v1818 = vadd.f32 %v1817, %v1559
          %v1819 = vadd.f32 %v1818, %v1560
          %v1820 = vadd.f32 %v1819, %v1561
          %v1821 = vadd.f32 %v1820, %v1562
          %v1822 = vadd.f32 %v1821, %v1563
          %v1823 = vadd.f32 %v1822, %v1564
          %v1824 = vadd.f32 %v1823, %v1565
          %v1825 = vadd.f32 %v1824, %v1566
          %v1826 = vadd.f32 %v1825, %v1567
          %v1827 = vadd.f32 %v1826, %v1568
          %v1828 = vadd.f32 %v1827, %v1569
          %v1829 = vadd.f32 %v1828, %v1570
          %v1830 = vadd.f32 %v1829, %v1571
          %v1831 = vadd.f32 %v1830, %v1572
          %v1832 = vadd.f32 %v1831, %v1573
          %v1833 = vadd.f32 %v1832, %v1574
          %v1834 = vadd.f32 %v1833, %v1575
          %v1835 = vadd.f32 %v1834, %v1576
          %v1836 = vadd.f32 %v1835, %v1577
          %v1837 = vadd.f32 %v1836, %v1578
          %v1838 = vadd.f32 %v1837, %v1579
          %v1839 = vadd.f32 %v1838, %v1580
          %v1840 = vadd.f32 %v1839, %v1581
          %v1841 = vadd.f32 %v1840, %v1582
          %v1842 = vadd.f32 %v1841, %v1583
          %v1843 = vadd.f32 %v1842, %v1584
          %v1844 = vadd.f32 %v1843, %v1585
          %v1845 = vadd.f32 %v1844, %v1586
          %v1846 = vadd.f32 %v1845, %v1587
          %v1847 = vadd.f32 %v1846, %v1588
          %v1848 = vadd.f32 %v1847, %v1589
          %v1849 = vrot.slane %v1848, 4
          %v1850 = vadd.f32 %v1848, %v1849
          %v1851 = vrot.slane %v1850, 2
          %v1852 = vadd.f32 %v1850, %v1851
          %v1853 = vrot.slane %v1852, 1
          %v1854 = vadd.f32 %v1852, %v1853
          %1855 = vst [vmem:[#allocation9] sm:$0x1] %v1854
          %v1856 = vmul.f32 %v1526, %v1526
          %v1857 = vmul.f32 %v1527, %v1527
          %v1858 = vmul.f32 %v1528, %v1528
          %v1859 = vmul.f32 %v1529, %v1529
          %v1860 = vmul.f32 %v1530, %v1530
          %v1861 = vmul.f32 %v1531, %v1531
          %v1862 = vmul.f32 %v1532, %v1532
          %v1863 = vmul.f32 %v1533, %v1533
          %v1864 = vmul.f32 %v1534, %v1534
          %v1865 = vmul.f32 %v1535, %v1535
          %v1866 = vmul.f32 %v1536, %v1536
          %v1867 = vmul.f32 %v1537, %v1537
          %v1868 = vmul.f32 %v1538, %v1538
          %v1869 = vmul.f32 %v1539, %v1539
          %v1870 = vmul.f32 %v1540, %v1540
          %v1871 = vmul.f32 %v1541, %v1541
          %v1872 = vmul.f32 %v1542, %v1542
          %v1873 = vmul.f32 %v1543, %v1543
          %v1874 = vmul.f32 %v1544, %v1544
          %v1875 = vmul.f32 %v1545, %v1545
          %v1876 = vmul.f32 %v1546, %v1546
          %v1877 = vmul.f32 %v1547, %v1547
          %v1878 = vmul.f32 %v1548, %v1548
          %v1879 = vmul.f32 %v1549, %v1549
          %v1880 = vmul.f32 %v1550, %v1550
          %v1881 = vmul.f32 %v1551, %v1551
          %v1882 = vmul.f32 %v1552, %v1552
          %v1883 = vmul.f32 %v1553, %v1553
          %v1884 = vmul.f32 %v1554, %v1554
          %v1885 = vmul.f32 %v1555, %v1555
          %v1886 = vmul.f32 %v1556, %v1556
          %v1887 = vmul.f32 %v1557, %v1557
          %v1888 = vmul.f32 %v1558, %v1558
          %v1889 = vmul.f32 %v1559, %v1559
          %v1890 = vmul.f32 %v1560, %v1560
          %v1891 = vmul.f32 %v1561, %v1561
          %v1892 = vmul.f32 %v1562, %v1562
          %v1893 = vmul.f32 %v1563, %v1563
          %v1894 = vmul.f32 %v1564, %v1564
          %v1895 = vmul.f32 %v1565, %v1565
          %v1896 = vmul.f32 %v1566, %v1566
          %v1897 = vmul.f32 %v1567, %v1567
          %v1898 = vmul.f32 %v1568, %v1568
          %v1899 = vmul.f32 %v1569, %v1569
          %v1900 = vmul.f32 %v1570, %v1570
          %v1901 = vmul.f32 %v1571, %v1571
          %v1902 = vmul.f32 %v1572, %v1572
          %v1903 = vmul.f32 %v1573, %v1573
          %v1904 = vmul.f32 %v1574, %v1574
          %v1905 = vmul.f32 %v1575, %v1575
          %v1906 = vmul.f32 %v1576, %v1576
          %v1907 = vmul.f32 %v1577, %v1577
          %v1908 = vmul.f32 %v1578, %v1578
          %v1909 = vmul.f32 %v1579, %v1579
          %v1910 = vmul.f32 %v1580, %v1580
          %v1911 = vmul.f32 %v1581, %v1581
          %v1912 = vmul.f32 %v1582, %v1582
          %v1913 = vmul.f32 %v1583, %v1583
          %v1914 = vmul.f32 %v1584, %v1584
          %v1915 = vmul.f32 %v1585, %v1585
          %v1916 = vmul.f32 %v1586, %v1586
          %v1917 = vmul.f32 %v1587, %v1587
          %v1918 = vmul.f32 %v1588, %v1588
          %v1919 = vmul.f32 %v1589, %v1589
          %v1920 = vadd.f32 %v1856, %v1857
          %v1921 = vadd.f32 %v1920, %v1858
          %v1922 = vadd.f32 %v1921, %v1859
          %v1923 = vadd.f32 %v1922, %v1860
          %v1924 = vadd.f32 %v1923, %v1861
          %v1925 = vadd.f32 %v1924, %v1862
          %v1926 = vadd.f32 %v1925, %v1863
          %v1927 = vadd.f32 %v1926, %v1864
          %v1928 = vadd.f32 %v1927, %v1865
          %v1929 = vadd.f32 %v1928, %v1866
          %v1930 = vadd.f32 %v1929, %v1867
          %v1931 = vadd.f32 %v1930, %v1868
          %v1932 = vadd.f32 %v1931, %v1869
          %v1933 = vadd.f32 %v1932, %v1870
          %v1934 = vadd.f32 %v1933, %v1871
          %v1935 = vadd.f32 %v1934, %v1872
          %v1936 = vadd.f32 %v1935, %v1873
          %v1937 = vadd.f32 %v1936, %v1874
          %v1938 = vadd.f32 %v1937, %v1875
          %v1939 = vadd.f32 %v1938, %v1876
          %v1940 = vadd.f32 %v1939, %v1877
          %v1941 = vadd.f32 %v1940, %v1878
          %v1942 = vadd.f32 %v1941, %v1879
          %v1943 = vadd.f32 %v1942, %v1880
          %v1944 = vadd.f32 %v1943, %v1881
          %v1945 = vadd.f32 %v1944, %v1882
          %v1946 = vadd.f32 %v1945, %v1883
          %v1947 = vadd.f32 %v1946, %v1884
          %v1948 = vadd.f32 %v1947, %v1885
          %v1949 = vadd.f32 %v1948, %v1886
          %v1950 = vadd.f32 %v1949, %v1887
          %v1951 = vadd.f32 %v1950, %v1888
          %v1952 = vadd.f32 %v1951, %v1889
          %v1953 = vadd.f32 %v1952, %v1890
          %v1954 = vadd.f32 %v1953, %v1891
          %v1955 = vadd.f32 %v1954, %v1892
          %v1956 = vadd.f32 %v1955, %v1893
          %v1957 = vadd.f32 %v1956, %v1894
          %v1958 = vadd.f32 %v1957, %v1895
          %v1959 = vadd.f32 %v1958, %v1896
          %v1960 = vadd.f32 %v1959, %v1897
          %v1961 = vadd.f32 %v1960, %v1898
          %v1962 = vadd.f32 %v1961, %v1899
          %v1963 = vadd.f32 %v1962, %v1900
          %v1964 = vadd.f32 %v1963, %v1901
          %v1965 = vadd.f32 %v1964, %v1902
          %v1966 = vadd.f32 %v1965, %v1903
          %v1967 = vadd.f32 %v1966, %v1904
          %v1968 = vadd.f32 %v1967, %v1905
          %v1969 = vadd.f32 %v1968, %v1906
          %v1970 = vadd.f32 %v1969, %v1907
          %v1971 = vadd.f32 %v1970, %v1908
          %v1972 = vadd.f32 %v1971, %v1909
          %v1973 = vadd.f32 %v1972, %v1910
          %v1974 = vadd.f32 %v1973, %v1911
          %v1975 = vadd.f32 %v1974, %v1912
          %v1976 = vadd.f32 %v1975, %v1913
          %v1977 = vadd.f32 %v1976, %v1914
          %v1978 = vadd.f32 %v1977, %v1915
          %v1979 = vadd.f32 %v1978, %v1916
          %v1980 = vadd.f32 %v1979, %v1917
          %v1981 = vadd.f32 %v1980, %v1918
          %v1982 = vadd.f32 %v1981, %v1919
          %v1983 = vrot.slane %v1982, 4
          %v1984 = vadd.f32 %v1982, %v1983
          %v1985 = vrot.slane %v1984, 2
          %v1986 = vadd.f32 %v1984, %v1985
          %v1987 = vrot.slane %v1986, 1
          %v1988 = vadd.f32 %v1986, %v1987
          %1989 = vst [vmem:[#allocation11] sm:$0x1] %v1988
        $region44: #{tpu_custom_call.1} parent=27 // pred_fallthru
          _
        // Predicated region
        $region45: #{tpu_custom_call.1} parent=27 // pred_check
          %p1990 = pneg %p108
        $region46: #{tpu_custom_call.1} parent=27 // pred_check_branch
          %1992 = sbr.rel (%p1990) target = $region48
        $region47: #{tpu_custom_call.1} parent=27 // pred_region
          %s1993 = smul.u32 4, %s28
          %1995 = vsyncadd [#allocation5], 0
          %s1996 = smul.addr %s1993, 4
          %s1997 = scalar_lea.hbm %s2, %s1996
          %s1998 = sshll.u32 [#allocation8], 4
          %s1999 = int_to_ptr.vmem [resolvable:$true] %s1998
          %s2000 = sshll.u32 %s1997, 4
          %s2001 = int_to_ptr.hbm [resolvable:$true] %s2000
          %2006 = dma.vmem_to_hbm [thread:$0]  %s1999, 4096, %s2001, [#allocation5], 64, 64, 4
        $region48: #{tpu_custom_call.1} parent=27 // pred_fallthru
          _
        // Predicated region
        $region49: #{tpu_custom_call.1} parent=27 // pred_check
          %p2007 = pneg %p134
        $region50: #{tpu_custom_call.1} parent=27 // pred_check_branch
          %2009 = sbr.rel (%p2007) target = $region52
        $region51: #{tpu_custom_call.1} parent=27 // pred_region
          %2011 = vsyncadd [#allocation10], 0
          %s2012 = scalar_lea.hbm %s3, %s28
          %s2014 = sshll.u32 [#allocation9], 4
          %s2015 = int_to_ptr.vmem [resolvable:$true] %s2014
          %s2016 = sshll.u32 %s2012, 4
          %s2017 = int_to_ptr.hbm [resolvable:$true] %s2016
          %2019 = dma.vmem_to_hbm [thread:$0]  %s2015, 16, %s2017, [#allocation10]
        $region52: #{tpu_custom_call.1} parent=27 // pred_fallthru
          _
        // Predicated region
        $region53: #{tpu_custom_call.1} parent=27 // pred_check
          %p2020 = pneg %p160
        $region54: #{tpu_custom_call.1} parent=27 // pred_check_branch
          %2022 = sbr.rel (%p2020) target = $region56
        $region55: #{tpu_custom_call.1} parent=27 // pred_region
          %2024 = vsyncadd [#allocation10], 0
          %s2025 = scalar_lea.hbm %s4, %s28
          %s2027 = sshll.u32 [#allocation11], 4
          %s2028 = int_to_ptr.vmem [resolvable:$true] %s2027
          %s2029 = sshll.u32 %s2025, 4
          %s2030 = int_to_ptr.hbm [resolvable:$true] %s2029
          %2032 = dma.vmem_to_hbm [thread:$0]  %s2028, 16, %s2030, [#allocation10]
        $region56: #{tpu_custom_call.1} parent=27 // pred_fallthru
          _
        // Predicated region
        $region57: #{tpu_custom_call.1} parent=27 // pred_check
          %p2033 = pneg %p108
        $region58: #{tpu_custom_call.1} parent=27 // pred_check_branch
          %2035 = sbr.rel (%p2033) target = $region60
        $region59: #{tpu_custom_call.1} parent=27 // pred_region
          %2037 = dma.done [#allocation5], 4096
        $region60: #{tpu_custom_call.1} parent=27 // pred_fallthru
          _
        // Predicated region
        $region61: #{tpu_custom_call.1} parent=27 // pred_check
          %p2038 = pneg %p134
        $region62: #{tpu_custom_call.1} parent=27 // pred_check_branch
          %2040 = sbr.rel (%p2038) target = $region64
        $region63: #{tpu_custom_call.1} parent=27 // pred_region
          %2042 = dma.done [#allocation10], 16
        $region64: #{tpu_custom_call.1} parent=27 // pred_fallthru
          _
        // Predicated region
        $region65: #{tpu_custom_call.1} parent=27 // pred_check
          %p2043 = pneg %p160
        $region66: #{tpu_custom_call.1} parent=27 // pred_check_branch
          %2045 = sbr.rel (%p2043) target = $region68
        $region67: #{tpu_custom_call.1} parent=27 // pred_region
          %2047 = dma.done [#allocation10], 16
        $region68: #{tpu_custom_call.1} parent=27 // pred_fallthru
          _
      $region28: #{tpu_custom_call.1} parent=5 // pred_fallthru
        _
      %p2048 = scmp.le.s32.totalorder 2, %s19
      // Predicated region
      $region69: #{tpu_custom_call.1} parent=5 // pred_check
        %p2049 = pneg %p2048
      $region70: #{tpu_custom_call.1} parent=5 // pred_check_branch
        %2051 = sbr.rel (%p2049) target = $region72
      $region71: #{tpu_custom_call.1} parent=5 // pred_region
        %s2052 = ssub.s32 %s19, 2
      $region72: #{tpu_custom_call.1} parent=5 // pred_fallthru
        _
    $region6: #{tpu_custom_call.1} parent=1 // loop_footer
      %s23 = sadd.s32 1, %s19
    $region7: #{tpu_custom_call.1} parent=1 // loop_footer_branch
      %18 = sbr.rel target = $region3
    $region8: #{tpu_custom_call.1} parent=1 // loop_exit
      _
    %2053 = vsyncpa [#allocation4], 1
    %s2054 = scalar_lea.sflag [#allocation4], 1
    %2055 = vsyncpa %s2054, 1
    %2056 = vsyncpa [#allocation7], 1
    %s2057 = scalar_lea.sflag [#allocation7], 1
    %2058 = vsyncpa %s2057, 1
    %2059 = vsyncpa [#allocation5], 1
    %s2060 = scalar_lea.sflag [#allocation5], 1
    %2061 = vsyncpa %s2060, 1
    %2062 = vsyncpa [#allocation10], 1

</llo_original>
